<compile_context>
chip_gen: v7x
topology: tpu7x:2x2x1
jax: 0.10.0
libtpu: 0.0.40
codegen_flags: <defaults>
</compile_context>

<pallas_src>
import jax
import jax.numpy as jnp
from jax.experimental import pallas as pl
from jax.experimental.pallas import tpu as pltpu


def _ceil_to(x, m):
    return -(-x // m) * m


# ---------------------------------------------------------------------------
# Kernel: one grid step processes BB graphs (rows = BB * Np node rows).
# ---------------------------------------------------------------------------
def _gcn_encoder_kernel(a_ref, x_ref, w1_ref, w2_ref, w3_ref, b_ref, o_ref):
    cdt = a_ref.dtype                  # compute dtype for MXU inputs (bf16 or f32)
    a = a_ref[...]                     # [rows, rows] block-diagonal A_hat (grid constant)
    b = b_ref[...]                     # [8, P] f32 biases: rows 0/1/2 = b1/b2/b3

    # layer 1: relu(A_hat @ (X W1) + b1)   (dropout p=0.5 == identity in eval)
    # X / W1 stay f32 (Cin is tiny: K=8 matmul, negligible cost, exact).
    h = jnp.dot(x_ref[...], w1_ref[...], preferred_element_type=jnp.float32)
    h = jnp.dot(a, h.astype(cdt), preferred_element_type=jnp.float32)
    h = jnp.maximum(h + b[0:1, :], 0.0)          # bias/ReLU in f32 (v5e VPU has no bf16)

    # layer 2: relu(A_hat @ (H W2) + b2)
    h = jnp.dot(h.astype(cdt), w2_ref[...], preferred_element_type=jnp.float32)
    h = jnp.dot(a, h.astype(cdt), preferred_element_type=jnp.float32)
    h = jnp.maximum(h + b[1:2, :], 0.0)

    # layer 3: A_hat @ (H W3) + b3
    h = jnp.dot(h.astype(cdt), w3_ref[...], preferred_element_type=jnp.float32)
    h = jnp.dot(a, h.astype(cdt), preferred_element_type=jnp.float32) + b[2:3, :]
    o_ref[...] = h.astype(o_ref.dtype)


# ---------------------------------------------------------------------------
# Glue (plain JAX): normalized adjacency, params, one-time prep, forward.
# ---------------------------------------------------------------------------
def build_norm_adj(edge_index, num_nodes):
    """Dense D^-1/2 (A + I) D^-1/2 following PyG GCNConv gcn_norm semantics."""
    row, col = edge_index[0], edge_index[1]
    loop = jnp.arange(num_nodes, dtype=edge_index.dtype)
    row = jnp.concatenate([row, loop])
    col = jnp.concatenate([col, loop])
    deg = jnp.zeros((num_nodes,), jnp.float32).at[col].add(1.0)
    dinv = jnp.where(deg > 0, jax.lax.rsqrt(deg), 0.0)
    norm = dinv[row] * dinv[col]
    # message flows row -> col, aggregated at col:  out[i] = sum_j A_hat[i, j] * x[j]
    a_hat = jnp.zeros((num_nodes, num_nodes), jnp.float32).at[col, row].add(norm)
    return a_hat


def init_params(key, in_channels=2, hidden_channels=32, out_channels=2):
    def glorot(k, shape):
        fan_in, fan_out = shape
        limit = (6.0 / (fan_in + fan_out)) ** 0.5
        return jax.random.uniform(k, shape, jnp.float32, -limit, limit)

    k1, k2, k3 = jax.random.split(key, 3)
    return dict(
        w1=glorot(k1, (in_channels, hidden_channels)),
        b1=jnp.zeros((1, hidden_channels), jnp.float32),
        w2=glorot(k2, (hidden_channels, hidden_channels)),
        b2=jnp.zeros((1, hidden_channels), jnp.float32),
        w3=glorot(k3, (hidden_channels, out_channels)),
        b3=jnp.zeros((1, out_channels), jnp.float32),
    )


def prepare_gcn_encoder(edge_index, num_nodes, params, *, graphs_per_block=None,
                        compute_dtype=jnp.bfloat16):
    """One-time prep: normalized adjacency, block-diag replication, weight/bias padding.

    Hoisted out of the per-call forward so the scatter/kron/pad XLA ops run once.
    """
    Cin, hid = params["w1"].shape
    Cout = params["w3"].shape[1]
    Np = _ceil_to(num_nodes, 8)
    if graphs_per_block is None:
        # ~256 node rows per grid step: fewer, larger steps (step-overhead bound kernel),
        # 256-aligned M for the 256x256 MXUs on v6e/v7x, while keeping the block-diagonal
        # aggregation waste acceptable on v5e. Typical batches keep the grid length >= 2
        # so v7x still shards steps across its two TensorCores.
        graphs_per_block = max(1, 256 // Np)
    BB = graphs_per_block
    rows = BB * Np
    P = max(128, _ceil_to(max(hid, Cout), 128))    # lane-dense hidden/output width
    Cin_p = _ceil_to(Cin, 8)                       # NOT padded to 128 (X is the streamed input)

    a_hat = build_norm_adj(edge_index, num_nodes)
    a_pad = jnp.zeros((Np, Np), jnp.float32).at[:num_nodes, :num_nodes].set(a_hat)
    a_blk = jnp.kron(jnp.eye(BB, dtype=jnp.float32), a_pad).astype(compute_dtype)

    w1 = jnp.zeros((Cin_p, P), jnp.float32).at[:Cin, :hid].set(params["w1"])         # f32
    w2 = jnp.zeros((P, P), jnp.float32).at[:hid, :hid].set(params["w2"]).astype(compute_dtype)
    w3 = jnp.zeros((P, P), jnp.float32).at[:hid, :Cout].set(params["w3"]).astype(compute_dtype)
    b_all = (jnp.zeros((8, P), jnp.float32)
             .at[0, :hid].set(params["b1"].reshape(-1))
             .at[1, :hid].set(params["b2"].reshape(-1))
             .at[2, :Cout].set(params["b3"].reshape(-1)))

    a_blk, w1, w2, w3, b_all = jax.device_put((a_blk, w1, w2, w3, b_all))
    return dict(a_blk=a_blk, w1=w1, w2=w2, w3=w3, b=b_all,
                meta=dict(N=num_nodes, Np=Np, BB=BB, rows=rows, P=P,
                          Cin=Cin, Cin_p=Cin_p, Cout=Cout,
                          compute_dtype=compute_dtype))


def gcn_encoder_forward(x, prep):
    """x: [B, N, Cin] (batch of pose graphs sharing edge_index) or [N, Cin]."""
    m = prep["meta"]
    single = (x.ndim == 2)
    if single:
        x = x[None]
    B, N, Cin = x.shape
    assert N == m["N"] and Cin == m["Cin"]
    Np, BB, rows, P, Cin_p = m["Np"], m["BB"], m["rows"], m["P"], m["Cin_p"]
    Bp = _ceil_to(B, BB)

    x_p = (jnp.zeros((Bp, Np, Cin_p), jnp.float32)
           .at[:B, :N, :Cin].set(x.astype(jnp.float32))
           .reshape(Bp * Np, Cin_p))

    grid = (Bp // BB,)
    const = lambda i: (0, 0)
    out = pl.pallas_call(
        _gcn_encoder_kernel,
        out_shape=jax.ShapeDtypeStruct((Bp * Np, P), m["compute_dtype"]),
        grid_spec=pltpu.PrefetchScalarGridSpec(
            num_scalar_prefetch=0,
            grid=grid,
            in_specs=[
                # Grid-constant operands: single-buffered (DMA elided after step 0,
                # no second VMEM copy).
                pl.BlockSpec((rows, rows), const, pipeline_mode=pl.Buffered(1)),   # A_blk
                # X is the only streamed input: default double-buffering.
                pl.BlockSpec((rows, Cin_p), lambda i: (i, 0)),                     # X block
                pl.BlockSpec((Cin_p, P), const, pipeline_mode=pl.Buffered(1)),     # W1 (f32)
                pl.BlockSpec((P, P), const, pipeline_mode=pl.Buffered(1)),         # W2
                pl.BlockSpec((P, P), const, pipeline_mode=pl.Buffered(1)),         # W3
                pl.BlockSpec((8, P), const, pipeline_mode=pl.Buffered(1)),         # biases
            ],
            out_specs=pl.BlockSpec((rows, P), lambda i: (i, 0)),
        ),
        compiler_params=pltpu.CompilerParams(
            dimension_semantics=("parallel",)),
    )(prep["a_blk"], x_p, prep["w1"], prep["w2"], prep["w3"], prep["b"])

    out = out.astype(jnp.float32).reshape(Bp, Np, P)[:B, :N, :m["Cout"]]
    return out[0] if single else out


# ---------------------------------------------------------------------------
# Pure-JAX reference (f32).
# ---------------------------------------------------------------------------
def gcn_encoder_reference(x, edge_index, params):
    single = (x.ndim == 2)
    if single:
        x = x[None]
    a_hat = build_norm_adj(edge_index, x.shape[1])
    h = jnp.einsum("ij,bjc->bic", a_hat, x @ params["w1"]) + params["b1"]
    h = jnp.maximum(h, 0.0)
    h = jnp.einsum("ij,bjc->bic", a_hat, h @ params["w2"]) + params["b2"]
    h = jnp.maximum(h, 0.0)
    h = jnp.einsum("ij,bjc->bic", a_hat, h @ params["w3"]) + params["b3"]
    return h[0] if single else h


if __name__ == "__main__":
    key = jax.random.PRNGKey(0)
    k_x, k_p = jax.random.split(key)

    # 16 pose joints, 2-D coordinates as node features; undirected chain skeleton.
    # 64 pose frames (graphs) share the same skeleton and are batched into one call.
    num_nodes, in_ch, hid_ch, out_ch = 16, 2, 32, 2
    batch = 64

    x = jax.random.normal(k_x, (batch, num_nodes, in_ch), jnp.float32)
    src = jnp.arange(num_nodes - 1, dtype=jnp.int32)
    dst = src + 1
    edge_index = jnp.stack(
        [jnp.concatenate([src, dst]), jnp.concatenate([dst, src])], axis=0
    )  # [2, 30]

    params = init_params(k_p, in_ch, hid_ch, out_ch)
    ref = gcn_encoder_reference(x, edge_index, params)

    # f32 compute path (exact-semantics check): BB=16 graphs/step -> rows=256, grid=(4,)
    prep_f32 = prepare_gcn_encoder(edge_index, num_nodes, params,
                                   compute_dtype=jnp.float32)
    out_f32 = jax.block_until_ready(gcn_encoder_forward(x, prep_f32))
    assert out_f32.shape == (batch, num_nodes, out_ch)
    assert jnp.allclose(out_f32, ref, atol=1e-3, rtol=1e-3)

    # bf16 fast path (f32 MXU accumulation, bf16 writeback) — looser tolerance
    prep_bf16 = prepare_gcn_encoder(edge_index, num_nodes, params,
                                    compute_dtype=jnp.bfloat16)
    out_bf16 = jax.block_until_ready(gcn_encoder_forward(x, prep_bf16))
    assert out_bf16.shape == (batch, num_nodes, out_ch)
    assert jnp.allclose(out_bf16.astype(jnp.float32), ref, atol=5e-2, rtol=5e-2)

    print("KERNEL_OK")
</pallas_src>

<mosaic_0001>
module attributes {stable_mosaic.version = 11 : i64} {
  func.func @_gcn_encoder_kernel(%arg0: i32, %arg1: memref<256x256xf32, #tpu.memory_space<vmem>>, %arg2: memref<256x8xf32, #tpu.memory_space<vmem>>, %arg3: memref<8x128xf32, #tpu.memory_space<vmem>>, %arg4: memref<128x128xf32, #tpu.memory_space<vmem>>, %arg5: memref<128x128xf32, #tpu.memory_space<vmem>>, %arg6: memref<8x128xf32, #tpu.memory_space<vmem>>, %arg7: memref<256x128xf32, #tpu.memory_space<vmem>>) attributes {dimension_semantics = [#tpu.dimension_semantics<parallel>], iteration_bounds = array<i64: 4>, scalar_prefetch = 0 : i64, scratch_operands = 0 : i64, tpu.core_type = #tpu.core_type<tc>, window_params = [{pipeline_mode = #tpu.pipeline_mode<synchronous>, transform_indices = @transform_0, window_bounds = array<i64: 256, 256>}, {transform_indices = @transform_1, window_bounds = array<i64: 256, 8>}, {pipeline_mode = #tpu.pipeline_mode<synchronous>, transform_indices = @transform_2, window_bounds = array<i64: 8, 128>}, {pipeline_mode = #tpu.pipeline_mode<synchronous>, transform_indices = @transform_3, window_bounds = array<i64: 128, 128>}, {pipeline_mode = #tpu.pipeline_mode<synchronous>, transform_indices = @transform_4, window_bounds = array<i64: 128, 128>}, {pipeline_mode = #tpu.pipeline_mode<synchronous>, transform_indices = @transform_5, window_bounds = array<i64: 8, 128>}, {transform_indices = @transform_6, window_bounds = array<i64: 256, 128>}]} {
    %c0 = arith.constant 0 : index
    %c0_0 = arith.constant 0 : index
    %0 = vector.load %arg1[%c0, %c0_0] : memref<256x256xf32, #tpu.memory_space<vmem>>, vector<256x256xf32>
    %c0_1 = arith.constant 0 : index
    %c0_2 = arith.constant 0 : index
    %1 = vector.load %arg6[%c0_1, %c0_2] : memref<8x128xf32, #tpu.memory_space<vmem>>, vector<8x128xf32>
    %c0_3 = arith.constant 0 : index
    %c0_4 = arith.constant 0 : index
    %2 = vector.load %arg2[%c0_3, %c0_4] : memref<256x8xf32, #tpu.memory_space<vmem>>, vector<256x8xf32>
    %c0_5 = arith.constant 0 : index
    %c0_6 = arith.constant 0 : index
    %3 = vector.load %arg3[%c0_5, %c0_6] : memref<8x128xf32, #tpu.memory_space<vmem>>, vector<8x128xf32>
    %cst = arith.constant dense<0.000000e+00> : vector<256x128xf32>
    %4 = tpu.matmul %2, %3, %cst {dimension_numbers = #tpu.dot_dimension_numbers<[1], [0], [0], [1], [0, 0, 1, 1], [], []>} : vector<256x8xf32>, vector<8x128xf32>, vector<256x128xf32> -> vector<256x128xf32>
    %cst_7 = arith.constant dense<0.000000e+00> : vector<256x128xf32>
    %5 = tpu.matmul %0, %4, %cst_7 {dimension_numbers = #tpu.dot_dimension_numbers<[1], [0], [0], [1], [0, 0, 1, 1], [], []>} : vector<256x256xf32>, vector<256x128xf32>, vector<256x128xf32> -> vector<256x128xf32>
    %6 = vector.extract_strided_slice %1 {offsets = [0, 0], sizes = [1, 128], strides = [1, 1]} : vector<8x128xf32> to vector<1x128xf32>
    %7 = vector.broadcast %6 : vector<1x128xf32> to vector<256x128xf32>
    %8 = arith.addf %5, %7 : vector<256x128xf32>
    %cst_8 = arith.constant 0.000000e+00 : f32
    %9 = vector.broadcast %cst_8 : f32 to vector<256x128xf32>
    %10 = arith.maximumf %8, %9 : vector<256x128xf32>
    %c0_9 = arith.constant 0 : index
    %c0_10 = arith.constant 0 : index
    %11 = vector.load %arg4[%c0_9, %c0_10] : memref<128x128xf32, #tpu.memory_space<vmem>>, vector<128x128xf32>
    %cst_11 = arith.constant dense<0.000000e+00> : vector<256x128xf32>
    %12 = tpu.matmul %10, %11, %cst_11 {dimension_numbers = #tpu.dot_dimension_numbers<[1], [0], [0], [1], [0, 0, 1, 1], [], []>} : vector<256x128xf32>, vector<128x128xf32>, vector<256x128xf32> -> vector<256x128xf32>
    %cst_12 = arith.constant dense<0.000000e+00> : vector<256x128xf32>
    %13 = tpu.matmul %0, %12, %cst_12 {dimension_numbers = #tpu.dot_dimension_numbers<[1], [0], [0], [1], [0, 0, 1, 1], [], []>} : vector<256x256xf32>, vector<256x128xf32>, vector<256x128xf32> -> vector<256x128xf32>
    %14 = vector.extract_strided_slice %1 {offsets = [1, 0], sizes = [1, 128], strides = [1, 1]} : vector<8x128xf32> to vector<1x128xf32>
    %15 = vector.broadcast %14 : vector<1x128xf32> to vector<256x128xf32>
    %16 = arith.addf %13, %15 : vector<256x128xf32>
    %cst_13 = arith.constant 0.000000e+00 : f32
    %17 = vector.broadcast %cst_13 : f32 to vector<256x128xf32>
    %18 = arith.maximumf %16, %17 : vector<256x128xf32>
    %c0_14 = arith.constant 0 : index
    %c0_15 = arith.constant 0 : index
    %19 = vector.load %arg5[%c0_14, %c0_15] : memref<128x128xf32, #tpu.memory_space<vmem>>, vector<128x128xf32>
    %cst_16 = arith.constant dense<0.000000e+00> : vector<256x128xf32>
    %20 = tpu.matmul %18, %19, %cst_16 {dimension_numbers = #tpu.dot_dimension_numbers<[1], [0], [0], [1], [0, 0, 1, 1], [], []>} : vector<256x128xf32>, vector<128x128xf32>, vector<256x128xf32> -> vector<256x128xf32>
    %cst_17 = arith.constant dense<0.000000e+00> : vector<256x128xf32>
    %21 = tpu.matmul %0, %20, %cst_17 {dimension_numbers = #tpu.dot_dimension_numbers<[1], [0], [0], [1], [0, 0, 1, 1], [], []>} : vector<256x256xf32>, vector<256x128xf32>, vector<256x128xf32> -> vector<256x128xf32>
    %22 = vector.extract_strided_slice %1 {offsets = [2, 0], sizes = [1, 128], strides = [1, 1]} : vector<8x128xf32> to vector<1x128xf32>
    %23 = vector.broadcast %22 : vector<1x128xf32> to vector<256x128xf32>
    %24 = arith.addf %21, %23 : vector<256x128xf32>
    %c0_18 = arith.constant 0 : index
    %c0_19 = arith.constant 0 : index
    %25 = vector.load %arg7[%c0_18, %c0_19] : memref<256x128xf32, #tpu.memory_space<vmem>>, vector<256x128xf32>
    tpu.vector_store %arg7[%c0_18, %c0_19], %24 {strides = array<i32>} : memref<256x128xf32, #tpu.memory_space<vmem>>, vector<256x128xf32>,
    return
  }
  func.func @transform_0(%arg0: i32) -> (i32, i32) {
    %c0_i32 = arith.constant 0 : i32
    %c0_i32_0 = arith.constant 0 : i32
    %c0_i32_1 = arith.constant 0 : i32
    return %c0_i32, %c0_i32_0 : i32, i32
  }
  func.func @transform_1(%arg0: i32) -> (i32, i32) {
    %c0_i32 = arith.constant 0 : i32
    %c0_i32_0 = arith.constant 0 : i32
    return %arg0, %c0_i32 : i32, i32
  }
  func.func @transform_2(%arg0: i32) -> (i32, i32) {
    %c0_i32 = arith.constant 0 : i32
    %c0_i32_0 = arith.constant 0 : i32
    %c0_i32_1 = arith.constant 0 : i32
    return %c0_i32, %c0_i32_0 : i32, i32
  }
  func.func @transform_3(%arg0: i32) -> (i32, i32) {
    %c0_i32 = arith.constant 0 : i32
    %c0_i32_0 = arith.constant 0 : i32
    %c0_i32_1 = arith.constant 0 : i32
    return %c0_i32, %c0_i32_0 : i32, i32
  }
  func.func @transform_4(%arg0: i32) -> (i32, i32) {
    %c0_i32 = arith.constant 0 : i32
    %c0_i32_0 = arith.constant 0 : i32
    %c0_i32_1 = arith.constant 0 : i32
    return %c0_i32, %c0_i32_0 : i32, i32
  }
  func.func @transform_5(%arg0: i32) -> (i32, i32) {
    %c0_i32 = arith.constant 0 : i32
    %c0_i32_0 = arith.constant 0 : i32
    %c0_i32_1 = arith.constant 0 : i32
    return %c0_i32, %c0_i32_0 : i32, i32
  }
  func.func @transform_6(%arg0: i32) -> (i32, i32) {
    %c0_i32 = arith.constant 0 : i32
    %c0_i32_0 = arith.constant 0 : i32
    return %arg0, %c0_i32 : i32, i32
  }
}

</mosaic_0001>

<llo_original>
// kernel: tpu_custom_call.1
$region0: #{tpu_custom_call.1}
  #allocation0 [shape = 'u32[]', space=smem, size = 0x4, offset = 0x4, fixed_abs, tag = 'smem constant byte address 0x4 - core index']
  #allocation1 [shape = 'u32[144,128]{1,0:T(1,128)}', space=vmem, size = 0x12000, scoped, tag = 'internal scratch']
  %s0 = inlined_call_operand.vmem [shape: f32[256,256], index: 0, kind: input, shape index: {}]
  %s1 = inlined_call_operand.vmem [shape: f32[1024,8], index: 1, kind: input, shape index: {}]
  %s2 = inlined_call_operand.vmem [shape: f32[8,128], index: 2, kind: input, shape index: {}]
  %s3 = inlined_call_operand.vmem [shape: f32[128,128], index: 3, kind: input, shape index: {}]
  %s4 = inlined_call_operand.vmem [shape: f32[128,128], index: 4, kind: input, shape index: {}]
  %s5 = inlined_call_operand.vmem [shape: f32[8,128], index: 5, kind: input, shape index: {}]
  %s6 = inlined_call_operand.hbm [shape: f32[1024,128], index: 6, kind: output, shape index: {}]
  %s7 = sld [smem:[#allocation0]]
  $region57: #{tpu_custom_call.1} parent=0
    _
  %s9 = ssub.s32 1, %s7
  %s10 = scalar_select 0, %s9, %s7
  $region1: #{tpu_custom_call.1} parent=0
    #allocation2 [shape = 'u8[262144]{0}', space=vmem, size = 0x40000, scoped, tag = 'output window, operand 0']
    #allocation3 [shape = 's32[2]{0}', space=sflag, size = 0x8, scoped, tag = 'scoped memory for tpu_custom_call.1']
    %11 = vsyncpa [#allocation3], 0
    %s12 = scalar_lea.sflag [#allocation3], 1
    %13 = vsyncpa %s12, 0
    loop: start=0, step=1, limit=6
    $region2: #{tpu_custom_call.1} parent=1 // loop_pre_header
      _
    $region3: #{tpu_custom_call.1} parent=1 // loop_header
      %s15 = sphi 0, %s19
      %p16 = scmp.ge.s32.totalorder %s15, 6
      %s23 = sphi 0, %s23
      %s25 = sphi 0, %s23
      %s26 = sphi 0, %s25
      %s40 = sphi 0, %s26
      %s46 = sphi 0, %s48
      %s49 = sphi 0, %s46
      %s50 = sphi 0, %s49
      %s66 = sphi 0, %s50
      %s70 = sphi 0, %s70
      %s72 = sphi 0, %s70
      %s73 = sphi 0, %s72
      %s87 = sphi 0, %s73
      %s91 = sphi 0, %s91
      %s93 = sphi 0, %s91
      %s94 = sphi 0, %s93
      %s108 = sphi 0, %s94
      %s112 = sphi 0, %s112
      %s114 = sphi 0, %s112
      %s115 = sphi 0, %s114
      %s129 = sphi 0, %s115
      %s133 = sphi 0, %s133
      %s135 = sphi 0, %s133
      %s136 = sphi 0, %s135
      %s150 = sphi 0, %s136
      %s156 = sphi 0, %s158
      %s159 = sphi 0, %s156
      %s160 = sphi 0, %s159
      %s176 = sphi 0, %s160
    $region4: #{tpu_custom_call.1} parent=1 // loop_header_branch
      %18 = sbr.rel (%p16) target = $region8
    $region5: #{tpu_custom_call.1} parent=1 // loop_body
      %s20 = ssub.s32 %s15, 1
      %s21 = ssub.s32 %s15, 2
      %s22 = sadd.s32 %s15, 1
      %s24 = sadd.s32 %s23, 1
      %p27 = scmp.eq.s32.totalorder %s15, 3
      %p28 = scmp.ne.s32.totalorder %s23, %s25
      %p29 = scmp.eq.s32.totalorder %s15, 0
      %p30 = por %p28, %p29
      %p31 = scmp.ne.s32.totalorder %s23, %s25
      %p32 = scmp.eq.s32.totalorder %s20, 3
      %p33 = por %p31, %p32
      %p34 = scmp.ne.s32.totalorder %s25, %s26
      %p35 = scmp.eq.s32.totalorder %s20, 0
      %p36 = por %p34, %p35
      %p37 = scmp.ne.s32.totalorder %s25, %s26
      %p38 = scmp.eq.s32.totalorder %s21, 3
      %p39 = por %p37, %p38
      %p41 = scmp.ne.s32.totalorder %s26, %s40
      %p42 = scmp.eq.s32.totalorder %s21, 0
      %p43 = por %p41, %p42
      %s44 = ssub.s32 %s15, %s22
      %p45 = scmp.eq.s32.totalorder %s44, 0
      %s47 = sadd.s32 %s46, 1
      %s48 = scalar_select %p45, %s46, %s47
      %p51 = pneg %p45
      %p52 = scmp.eq.s32.totalorder %s15, 3
      %p53 = por %p51, %p52
      %p54 = scmp.ne.s32.totalorder %s46, %s49
      %p55 = scmp.eq.s32.totalorder %s15, 0
      %p56 = por %p54, %p55
      %p57 = scmp.ne.s32.totalorder %s46, %s49
      %p58 = scmp.eq.s32.totalorder %s20, 3
      %p59 = por %p57, %p58
      %p60 = scmp.ne.s32.totalorder %s49, %s50
      %p61 = scmp.eq.s32.totalorder %s20, 0
      %p62 = por %p60, %p61
      %p63 = scmp.ne.s32.totalorder %s49, %s50
      %p64 = scmp.eq.s32.totalorder %s21, 3
      %p65 = por %p63, %p64
      %p67 = scmp.ne.s32.totalorder %s50, %s66
      %p68 = scmp.eq.s32.totalorder %s21, 0
      %p69 = por %p67, %p68
      %s71 = sadd.s32 %s70, 1
      %p74 = scmp.eq.s32.totalorder %s15, 3
      %p75 = scmp.ne.s32.totalorder %s70, %s72
      %p76 = scmp.eq.s32.totalorder %s15, 0
      %p77 = por %p75, %p76
      %p78 = scmp.ne.s32.totalorder %s70, %s72
      %p79 = scmp.eq.s32.totalorder %s20, 3
      %p80 = por %p78, %p79
      %p81 = scmp.ne.s32.totalorder %s72, %s73
      %p82 = scmp.eq.s32.totalorder %s20, 0
      %p83 = por %p81, %p82
      %p84 = scmp.ne.s32.totalorder %s72, %s73
      %p85 = scmp.eq.s32.totalorder %s21, 3
      %p86 = por %p84, %p85
      %p88 = scmp.ne.s32.totalorder %s73, %s87
      %p89 = scmp.eq.s32.totalorder %s21, 0
      %p90 = por %p88, %p89
      %s92 = sadd.s32 %s91, 1
      %p95 = scmp.eq.s32.totalorder %s15, 3
      %p96 = scmp.ne.s32.totalorder %s91, %s93
      %p97 = scmp.eq.s32.totalorder %s15, 0
      %p98 = por %p96, %p97
      %p99 = scmp.ne.s32.totalorder %s91, %s93
      %p100 = scmp.eq.s32.totalorder %s20, 3
      %p101 = por %p99, %p100
      %p102 = scmp.ne.s32.totalorder %s93, %s94
      %p103 = scmp.eq.s32.totalorder %s20, 0
      %p104 = por %p102, %p103
      %p105 = scmp.ne.s32.totalorder %s93, %s94
      %p106 = scmp.eq.s32.totalorder %s21, 3
      %p107 = por %p105, %p106
      %p109 = scmp.ne.s32.totalorder %s94, %s108
      %p110 = scmp.eq.s32.totalorder %s21, 0
      %p111 = por %p109, %p110
      %s113 = sadd.s32 %s112, 1
      %p116 = scmp.eq.s32.totalorder %s15, 3
      %p117 = scmp.ne.s32.totalorder %s112, %s114
      %p118 = scmp.eq.s32.totalorder %s15, 0
      %p119 = por %p117, %p118
      %p120 = scmp.ne.s32.totalorder %s112, %s114
      %p121 = scmp.eq.s32.totalorder %s20, 3
      %p122 = por %p120, %p121
      %p123 = scmp.ne.s32.totalorder %s114, %s115
      %p124 = scmp.eq.s32.totalorder %s20, 0
      %p125 = por %p123, %p124
      %p126 = scmp.ne.s32.totalorder %s114, %s115
      %p127 = scmp.eq.s32.totalorder %s21, 3
      %p128 = por %p126, %p127
      %p130 = scmp.ne.s32.totalorder %s115, %s129
      %p131 = scmp.eq.s32.totalorder %s21, 0
      %p132 = por %p130, %p131
      %s134 = sadd.s32 %s133, 1
      %p137 = scmp.eq.s32.totalorder %s15, 3
      %p138 = scmp.ne.s32.totalorder %s133, %s135
      %p139 = scmp.eq.s32.totalorder %s15, 0
      %p140 = por %p138, %p139
      %p141 = scmp.ne.s32.totalorder %s133, %s135
      %p142 = scmp.eq.s32.totalorder %s20, 3
      %p143 = por %p141, %p142
      %p144 = scmp.ne.s32.totalorder %s135, %s136
      %p145 = scmp.eq.s32.totalorder %s20, 0
      %p146 = por %p144, %p145
      %p147 = scmp.ne.s32.totalorder %s135, %s136
      %p148 = scmp.eq.s32.totalorder %s21, 3
      %p149 = por %p147, %p148
      %p151 = scmp.ne.s32.totalorder %s136, %s150
      %p152 = scmp.eq.s32.totalorder %s21, 0
      %p153 = por %p151, %p152
      %s154 = ssub.s32 %s15, %s22
      %p155 = scmp.eq.s32.totalorder %s154, 0
      %s157 = sadd.s32 %s156, 1
      %s158 = scalar_select %p155, %s156, %s157
      %p161 = pneg %p155
      %p162 = scmp.eq.s32.totalorder %s15, 3
      %p163 = por %p161, %p162
      %p164 = scmp.ne.s32.totalorder %s156, %s159
      %p165 = scmp.eq.s32.totalorder %s15, 0
      %p166 = por %p164, %p165
      %p167 = scmp.ne.s32.totalorder %s156, %s159
      %p168 = scmp.eq.s32.totalorder %s20, 3
      %p169 = por %p167, %p168
      %p170 = scmp.ne.s32.totalorder %s159, %s160
      %p171 = scmp.eq.s32.totalorder %s20, 0
      %p172 = por %p170, %p171
      %p173 = scmp.ne.s32.totalorder %s159, %s160
      %p174 = scmp.eq.s32.totalorder %s21, 3
      %p175 = por %p173, %p174
      %p177 = scmp.ne.s32.totalorder %s160, %s176
      %p178 = scmp.eq.s32.totalorder %s21, 0
      %p179 = por %p177, %p178
      %p180 = scmp.le.s32.totalorder 1, %s15
      %p181 = scmp.lt.s32.totalorder %s15, 5
      %p182 = pnand %p180, %p181
      %p183 = pneg %p182
      // Predicated region
      $region9: #{tpu_custom_call.1} parent=5 // pred_check
        _
      $region10: #{tpu_custom_call.1} parent=5 // pred_check_branch
        %185 = sbr.rel (%p182) target = $region12
      $region11: #{tpu_custom_call.1} parent=5 // pred_region
        %s186 = ssub.s32 %s15, 1
        // Predicated region
        $region13: #{tpu_custom_call.1} parent=11 // pred_check
          %p187 = pneg %p36
        $region14: #{tpu_custom_call.1} parent=11 // pred_check_branch
          %189 = sbr.rel (%p187) target = $region16
        $region15: #{tpu_custom_call.1} parent=11 // pred_region
          _
        $region16: #{tpu_custom_call.1} parent=11 // pred_fallthru
          _
        // Predicated region
        $region17: #{tpu_custom_call.1} parent=11 // pred_check
          %p190 = pneg %p83
        $region18: #{tpu_custom_call.1} parent=11 // pred_check_branch
          %192 = sbr.rel (%p190) target = $region20
        $region19: #{tpu_custom_call.1} parent=11 // pred_region
          _
        $region20: #{tpu_custom_call.1} parent=11 // pred_fallthru
          _
        // Predicated region
        $region21: #{tpu_custom_call.1} parent=11 // pred_check
          %p193 = pneg %p104
        $region22: #{tpu_custom_call.1} parent=11 // pred_check_branch
          %195 = sbr.rel (%p193) target = $region24
        $region23: #{tpu_custom_call.1} parent=11 // pred_region
          _
        $region24: #{tpu_custom_call.1} parent=11 // pred_fallthru
          _
        // Predicated region
        $region25: #{tpu_custom_call.1} parent=11 // pred_check
          %p196 = pneg %p125
        $region26: #{tpu_custom_call.1} parent=11 // pred_check_branch
          %198 = sbr.rel (%p196) target = $region28
        $region27: #{tpu_custom_call.1} parent=11 // pred_region
          _
        $region28: #{tpu_custom_call.1} parent=11 // pred_fallthru
          _
        // Predicated region
        $region29: #{tpu_custom_call.1} parent=11 // pred_check
          %p199 = pneg %p146
        $region30: #{tpu_custom_call.1} parent=11 // pred_check_branch
          %201 = sbr.rel (%p199) target = $region32
        $region31: #{tpu_custom_call.1} parent=11 // pred_region
          _
        $region32: #{tpu_custom_call.1} parent=11 // pred_fallthru
          _
      $region12: #{tpu_custom_call.1} parent=5 // pred_fallthru
        _
      %p202 = scmp.lt.s32.totalorder %s15, 4
      // Predicated region
      $region33: #{tpu_custom_call.1} parent=5 // pred_check
        %p203 = pneg %p202
      $region34: #{tpu_custom_call.1} parent=5 // pred_check_branch
        %205 = sbr.rel (%p203) target = $region36
      $region35: #{tpu_custom_call.1} parent=5 // pred_region
        // Predicated region
        $region37: #{tpu_custom_call.1} parent=35 // pred_check
          %p206 = pneg %p56
        $region38: #{tpu_custom_call.1} parent=35 // pred_check_branch
          %208 = sbr.rel (%p206) target = $region40
        $region39: #{tpu_custom_call.1} parent=35 // pred_region
          %s209 = smul.u32 32, %s15
          %p210 = scmp.lt.s32.totalorder %s209, 127
          %s211 = scalar_select %p210, %s209, 127
          %s212 = smul.addr %s211, 8
          %s213 = scalar_lea.vmem %s1, %s212
          %s214 = smul.u32 32, %s15
        $region40: #{tpu_custom_call.1} parent=35 // pred_fallthru
          _
      $region36: #{tpu_custom_call.1} parent=5 // pred_fallthru
        _
      %p215 = scmp.le.s32.totalorder 1, %s15
      %p216 = scmp.lt.s32.totalorder %s15, 5
      %p217 = pnand %p215, %p216
      %p218 = pneg %p217
      // Predicated region
      $region41: #{tpu_custom_call.1} parent=5 // pred_check
        _
      $region42: #{tpu_custom_call.1} parent=5 // pred_check_branch
        %220 = sbr.rel (%p217) target = $region44
      $region43: #{tpu_custom_call.1} parent=5 // pred_region
        %s221 = ssub.s32 %s15, 1
        %p222 = pneg %p36
        %p223 = pneg %p33
        %s224 = smul.u32 32, %s20
        %p225 = scmp.lt.s32.totalorder %s224, 127
        %s226 = scalar_select %p225, %s224, 127
        %s227 = smul.addr %s226, 8
        %s228 = scalar_lea.vmem %s1, %s227
        %p229 = pneg %p62
        %p230 = pneg %p59
        %p231 = pneg %p83
        %p232 = pneg %p80
        %p233 = pneg %p104
        %p234 = pneg %p101
        %p235 = pneg %p125
        %p236 = pneg %p122
        %p237 = pneg %p146
        %p238 = pneg %p143
        %p239 = pneg %p172
        %p240 = pneg %p169
        %s241 = sand.u32 %s159, 1
        %s242 = scalar_lea.sflag [#allocation3], %s241
        %s243 = sand.u32 %s159, 1
        %s244 = smul.addr %s243, 256
        %s245 = scalar_lea.vmem [#allocation2], %s244
        %s246 = smul.u32 32, %s20
        %p247 = scmp.lt.s32.totalorder %s246, 127
        %s248 = scalar_select %p247, %s246, 127
        %s249 = smul.addr %s248, 8
        %s250 = scalar_lea.vmem %s1, %s249
        %s251 = smul.u32 32, %s20
        %s252 = smul.u32 32, %s20
        %v253 = vld [vmem:[%s0] sm:$0xff]
        %v254 = vld [vmem:[%s0 + $0x8] sm:$0xff]
        %v255 = vld [vmem:[%s0 + $0x10] sm:$0xff]
        %v256 = vld [vmem:[%s0 + $0x18] sm:$0xff]
        %v257 = vld [vmem:[%s0 + $0x20] sm:$0xff]
        %v258 = vld [vmem:[%s0 + $0x28] sm:$0xff]
        %v259 = vld [vmem:[%s0 + $0x30] sm:$0xff]
        %v260 = vld [vmem:[%s0 + $0x38] sm:$0xff]
        %v261 = vld [vmem:[%s0 + $0x40] sm:$0xff]
        %v262 = vld [vmem:[%s0 + $0x48] sm:$0xff]
        %v263 = vld [vmem:[%s0 + $0x50] sm:$0xff]
        %v264 = vld [vmem:[%s0 + $0x58] sm:$0xff]
        %v265 = vld [vmem:[%s0 + $0x60] sm:$0xff]
        %v266 = vld [vmem:[%s0 + $0x68] sm:$0xff]
        %v267 = vld [vmem:[%s0 + $0x70] sm:$0xff]
        %v268 = vld [vmem:[%s0 + $0x78] sm:$0xff]
        %v269 = vld [vmem:[%s0 + $0x80] sm:$0xff]
        %v270 = vld [vmem:[%s0 + $0x88] sm:$0xff]
        %v271 = vld [vmem:[%s0 + $0x90] sm:$0xff]
        %v272 = vld [vmem:[%s0 + $0x98] sm:$0xff]
        %v273 = vld [vmem:[%s0 + $0xa0] sm:$0xff]
        %v274 = vld [vmem:[%s0 + $0xa8] sm:$0xff]
        %v275 = vld [vmem:[%s0 + $0xb0] sm:$0xff]
        %v276 = vld [vmem:[%s0 + $0xb8] sm:$0xff]
        %v277 = vld [vmem:[%s0 + $0xc0] sm:$0xff]
        %v278 = vld [vmem:[%s0 + $0xc8] sm:$0xff]
        %v279 = vld [vmem:[%s0 + $0xd0] sm:$0xff]
        %v280 = vld [vmem:[%s0 + $0xd8] sm:$0xff]
        %v281 = vld [vmem:[%s0 + $0xe0] sm:$0xff]
        %v282 = vld [vmem:[%s0 + $0xe8] sm:$0xff]
        %v283 = vld [vmem:[%s0 + $0xf0] sm:$0xff]
        %v284 = vld [vmem:[%s0 + $0xf8] sm:$0xff]
        %v285 = vld [vmem:[%s0 + $0x100] sm:$0xff]
        %v286 = vld [vmem:[%s0 + $0x108] sm:$0xff]
        %v287 = vld [vmem:[%s0 + $0x110] sm:$0xff]
        %v288 = vld [vmem:[%s0 + $0x118] sm:$0xff]
        %v289 = vld [vmem:[%s0 + $0x120] sm:$0xff]
        %v290 = vld [vmem:[%s0 + $0x128] sm:$0xff]
        %v291 = vld [vmem:[%s0 + $0x130] sm:$0xff]
        %v292 = vld [vmem:[%s0 + $0x138] sm:$0xff]
        %v293 = vld [vmem:[%s0 + $0x140] sm:$0xff]
        %v294 = vld [vmem:[%s0 + $0x148] sm:$0xff]
        %v295 = vld [vmem:[%s0 + $0x150] sm:$0xff]
        %v296 = vld [vmem:[%s0 + $0x158] sm:$0xff]
        %v297 = vld [vmem:[%s0 + $0x160] sm:$0xff]
        %v298 = vld [vmem:[%s0 + $0x168] sm:$0xff]
        %v299 = vld [vmem:[%s0 + $0x170] sm:$0xff]
        %v300 = vld [vmem:[%s0 + $0x178] sm:$0xff]
        %v301 = vld [vmem:[%s0 + $0x180] sm:$0xff]
        %v302 = vld [vmem:[%s0 + $0x188] sm:$0xff]
        %v303 = vld [vmem:[%s0 + $0x190] sm:$0xff]
        %v304 = vld [vmem:[%s0 + $0x198] sm:$0xff]
        %v305 = vld [vmem:[%s0 + $0x1a0] sm:$0xff]
        %v306 = vld [vmem:[%s0 + $0x1a8] sm:$0xff]
        %v307 = vld [vmem:[%s0 + $0x1b0] sm:$0xff]
        %v308 = vld [vmem:[%s0 + $0x1b8] sm:$0xff]
        %v309 = vld [vmem:[%s0 + $0x1c0] sm:$0xff]
        %v310 = vld [vmem:[%s0 + $0x1c8] sm:$0xff]
        %v311 = vld [vmem:[%s0 + $0x1d0] sm:$0xff]
        %v312 = vld [vmem:[%s0 + $0x1d8] sm:$0xff]
        %v313 = vld [vmem:[%s0 + $0x1e0] sm:$0xff]
        %v314 = vld [vmem:[%s0 + $0x1e8] sm:$0xff]
        %v315 = vld [vmem:[%s0 + $0x1f0] sm:$0xff]
        %v316 = vld [vmem:[%s0 + $0x1f8] sm:$0xff]
        %v317 = vld [vmem:[%s5] sm:$0xff]
        %v318 = vld [vmem:[%s250] sm:$0xff]
        %v319 = vld [vmem:[%s250 + $0x8] sm:$0xff]
        %v320 = vld [vmem:[%s250 + $0x10] sm:$0xff]
        %v321 = vld [vmem:[%s250 + $0x18] sm:$0xff]
        %v322 = vld [vmem:[%s250 + $0x20] sm:$0xff]
        %v323 = vld [vmem:[%s250 + $0x28] sm:$0xff]
        %v324 = vld [vmem:[%s250 + $0x30] sm:$0xff]
        %v325 = vld [vmem:[%s250 + $0x38] sm:$0xff]
        %v326 = vld [vmem:[%s250 + $0x40] sm:$0xff]
        %v327 = vld [vmem:[%s250 + $0x48] sm:$0xff]
        %v328 = vld [vmem:[%s250 + $0x50] sm:$0xff]
        %v329 = vld [vmem:[%s250 + $0x58] sm:$0xff]
        %v330 = vld [vmem:[%s250 + $0x60] sm:$0xff]
        %v331 = vld [vmem:[%s250 + $0x68] sm:$0xff]
        %v332 = vld [vmem:[%s250 + $0x70] sm:$0xff]
        %v333 = vld [vmem:[%s250 + $0x78] sm:$0xff]
        %v334 = vld [vmem:[%s250 + $0x80] sm:$0xff]
        %v335 = vld [vmem:[%s250 + $0x88] sm:$0xff]
        %v336 = vld [vmem:[%s250 + $0x90] sm:$0xff]
        %v337 = vld [vmem:[%s250 + $0x98] sm:$0xff]
        %v338 = vld [vmem:[%s250 + $0xa0] sm:$0xff]
        %v339 = vld [vmem:[%s250 + $0xa8] sm:$0xff]
        %v340 = vld [vmem:[%s250 + $0xb0] sm:$0xff]
        %v341 = vld [vmem:[%s250 + $0xb8] sm:$0xff]
        %v342 = vld [vmem:[%s250 + $0xc0] sm:$0xff]
        %v343 = vld [vmem:[%s250 + $0xc8] sm:$0xff]
        %v344 = vld [vmem:[%s250 + $0xd0] sm:$0xff]
        %v345 = vld [vmem:[%s250 + $0xd8] sm:$0xff]
        %v346 = vld [vmem:[%s250 + $0xe0] sm:$0xff]
        %v347 = vld [vmem:[%s250 + $0xe8] sm:$0xff]
        %v348 = vld [vmem:[%s250 + $0xf0] sm:$0xff]
        %v349 = vld [vmem:[%s250 + $0xf8] sm:$0xff]
        %v350 = vld [vmem:[%s2] sm:$0xff]
        %vm351 = vcmask 64512
        %v353 = vsel %vm351, %v318, 0
        %v356 = vsel %vm351, %v319, 0
        %v359 = vsel %vm351, %v320, 0
        %v362 = vsel %vm351, %v321, 0
        %v365 = vsel %vm351, %v322, 0
        %v368 = vsel %vm351, %v323, 0
        %v371 = vsel %vm351, %v324, 0
        %v374 = vsel %vm351, %v325, 0
        %v377 = vsel %vm351, %v326, 0
        %v380 = vsel %vm351, %v327, 0
        %v383 = vsel %vm351, %v328, 0
        %v386 = vsel %vm351, %v329, 0
        %v389 = vsel %vm351, %v330, 0
        %v392 = vsel %vm351, %v331, 0
        %v395 = vsel %vm351, %v332, 0
        %v398 = vsel %vm351, %v333, 0
        %v401 = vsel %vm351, %v334, 0
        %v404 = vsel %vm351, %v335, 0
        %v407 = vsel %vm351, %v336, 0
        %v410 = vsel %vm351, %v337, 0
        %v413 = vsel %vm351, %v338, 0
        %v416 = vsel %vm351, %v339, 0
        %v419 = vsel %vm351, %v340, 0
        %v422 = vsel %vm351, %v341, 0
        %v425 = vsel %vm351, %v342, 0
        %v428 = vsel %vm351, %v343, 0
        %v431 = vsel %vm351, %v344, 0
        %v434 = vsel %vm351, %v345, 0
        %v437 = vsel %vm351, %v346, 0
        %v440 = vsel %vm351, %v347, 0
        %v443 = vsel %vm351, %v348, 0
        %v446 = vsel %vm351, %v349, 0
        %448 = vmatprep.subr.mxu0 0.0
        %449 = vmatpush1.msra.mxu0 %v350
        %450 = vmatprep.subr.mxu0 0.0
        %451 = vmatpush1.msra.mxu0 0.0
        %452 = vmatprep.subr.mxu0 0.0
        %453 = vmatpush1.msra.mxu0 0.0
        %454 = vmatprep.subr.mxu0 0.0
        %455 = vmatpush1.msra.mxu0 0.0
        %456 = vmatprep.subr.mxu0 0.0
        %457 = vmatpush1.msra.mxu0 0.0
        %458 = vmatprep.subr.mxu0 0.0
        %459 = vmatpush1.msra.mxu0 0.0
        %460 = vmatprep.subr.mxu0 0.0
        %461 = vmatpush1.msra.mxu0 0.0
        %462 = vmatprep.subr.mxu0 0.0
        %463 = vmatpush1.msra.mxu0 0.0
        %464 = vmatprep.subr.mxu0 0.0
        %465 = vmatpush1.msra.mxu0 0.0
        %466 = vmatprep.subr.mxu0 0.0
        %467 = vmatpush1.msra.mxu0 0.0
        %468 = vmatprep.subr.mxu0 0.0
        %469 = vmatpush1.msra.mxu0 0.0
        %470 = vmatprep.subr.mxu0 0.0
        %471 = vmatpush1.msra.mxu0 0.0
        %472 = vmatprep.subr.mxu0 0.0
        %473 = vmatpush1.msra.mxu0 0.0
        %474 = vmatprep.subr.mxu0 0.0
        %475 = vmatpush1.msra.mxu0 0.0
        %476 = vmatprep.subr.mxu0 0.0
        %477 = vmatpush1.msra.mxu0 0.0
        %478 = vmatprep.subr.mxu0 0.0
        %479 = vmatpush1.msra.mxu0 0.0
        %480 = vmatprep.subr.mxu0 0.0
        %481 = vmatpush1.msra.mxu0 0.0
        %482 = vmatprep.subr.mxu0 0.0
        %483 = vmatpush1.msra.mxu0 0.0
        %484 = vmatprep.subr.mxu0 0.0
        %485 = vmatpush1.msra.mxu0 0.0
        %486 = vmatprep.subr.mxu0 0.0
        %487 = vmatpush1.msra.mxu0 0.0
        %488 = vmatprep.subr.mxu0 0.0
        %489 = vmatpush1.msra.mxu0 0.0
        %490 = vmatprep.subr.mxu0 0.0
        %491 = vmatpush1.msra.mxu0 0.0
        %492 = vmatprep.subr.mxu0 0.0
        %493 = vmatpush1.msra.mxu0 0.0
        %494 = vmatprep.subr.mxu0 0.0
        %495 = vmatpush1.msra.mxu0 0.0
        %496 = vmatprep.subr.mxu0 0.0
        %497 = vmatpush1.msra.mxu0 0.0
        %498 = vmatprep.subr.mxu0 0.0
        %499 = vmatpush1.msra.mxu0 0.0
        %500 = vmatprep.subr.mxu0 0.0
        %501 = vmatpush1.msra.mxu0 0.0
        %502 = vmatprep.subr.mxu0 0.0
        %503 = vmatpush1.msra.mxu0 0.0
        %504 = vmatprep.subr.mxu0 0.0
        %505 = vmatpush1.msra.mxu0 0.0
        %506 = vmatprep.subr.mxu0 0.0
        %507 = vmatpush1.msra.mxu0 0.0
        %508 = vmatprep.subr.mxu0 0.0
        %509 = vmatpush1.msra.mxu0 0.0
        %510 = vmatprep.subr.mxu0 0.0
        %511 = vmatpush1.msra.mxu0 0.0
        %512 = vmatprep.mubr.f32.mxu0 0.0
        %513 = vmatmul.mubr.f32.gmra.mrb[0].mxu0 %v353
        %v514 = vpop.f32.mrb[0].mxu0
        %v515 = vadd.f32 0.0, %v514
        %v516 = vpop.f32.mrb[0].mxu0
        %517 = vmatprep.mubr.f32.mxu0 0.0
        %518 = vmatmul.mubr.f32.gmra.mrb[0].mxu0 %v356
        %v519 = vpop.f32.mrb[0].mxu0
        %v520 = vadd.f32 0.0, %v519
        %v521 = vpop.f32.mrb[0].mxu0
        %522 = vmatprep.mubr.f32.mxu0 0.0
        %523 = vmatmul.mubr.f32.gmra.mrb[0].mxu0 %v359
        %v524 = vpop.f32.mrb[0].mxu0
        %v525 = vadd.f32 0.0, %v524
        %v526 = vpop.f32.mrb[0].mxu0
        %527 = vmatprep.mubr.f32.mxu0 0.0
        %528 = vmatmul.mubr.f32.gmra.mrb[0].mxu0 %v362
        %v529 = vpop.f32.mrb[0].mxu0
        %v530 = vadd.f32 0.0, %v529
        %v531 = vpop.f32.mrb[0].mxu0
        %532 = vmatprep.mubr.f32.mxu0 0.0
        %533 = vmatmul.mubr.f32.gmra.mrb[0].mxu0 %v365
        %v534 = vpop.f32.mrb[0].mxu0
        %v535 = vadd.f32 0.0, %v534
        %v536 = vpop.f32.mrb[0].mxu0
        %537 = vmatprep.mubr.f32.mxu0 0.0
        %538 = vmatmul.mubr.f32.gmra.mrb[0].mxu0 %v368
        %v539 = vpop.f32.mrb[0].mxu0
        %v540 = vadd.f32 0.0, %v539
        %v541 = vpop.f32.mrb[0].mxu0
        %542 = vmatprep.mubr.f32.mxu0 0.0
        %543 = vmatmul.mubr.f32.gmra.mrb[0].mxu0 %v371
        %v544 = vpop.f32.mrb[0].mxu0
        %v545 = vadd.f32 0.0, %v544
        %v546 = vpop.f32.mrb[0].mxu0
        %547 = vmatprep.mubr.f32.mxu0 0.0
        %548 = vmatmul.mubr.f32.gmra.mrb[0].mxu0 %v374
        %v549 = vpop.f32.mrb[0].mxu0
        %v550 = vadd.f32 0.0, %v549
        %v551 = vpop.f32.mrb[0].mxu0
        %552 = vmatprep.mubr.f32.mxu0 0.0
        %553 = vmatmul.mubr.f32.gmra.mrb[0].mxu0 %v377
        %v554 = vpop.f32.mrb[0].mxu0
        %v555 = vadd.f32 0.0, %v554
        %v556 = vpop.f32.mrb[0].mxu0
        %557 = vmatprep.mubr.f32.mxu0 0.0
        %558 = vmatmul.mubr.f32.gmra.mrb[0].mxu0 %v380
        %v559 = vpop.f32.mrb[0].mxu0
        %v560 = vadd.f32 0.0, %v559
        %v561 = vpop.f32.mrb[0].mxu0
        %562 = vmatprep.mubr.f32.mxu0 0.0
        %563 = vmatmul.mubr.f32.gmra.mrb[0].mxu0 %v383
        %v564 = vpop.f32.mrb[0].mxu0
        %v565 = vadd.f32 0.0, %v564
        %v566 = vpop.f32.mrb[0].mxu0
        %567 = vmatprep.mubr.f32.mxu0 0.0
        %568 = vmatmul.mubr.f32.gmra.mrb[0].mxu0 %v386
        %v569 = vpop.f32.mrb[0].mxu0
        %v570 = vadd.f32 0.0, %v569
        %v571 = vpop.f32.mrb[0].mxu0
        %572 = vmatprep.mubr.f32.mxu0 0.0
        %573 = vmatmul.mubr.f32.gmra.mrb[0].mxu0 %v389
        %v574 = vpop.f32.mrb[0].mxu0
        %v575 = vadd.f32 0.0, %v574
        %v576 = vpop.f32.mrb[0].mxu0
        %577 = vmatprep.mubr.f32.mxu0 0.0
        %578 = vmatmul.mubr.f32.gmra.mrb[0].mxu0 %v392
        %v579 = vpop.f32.mrb[0].mxu0
        %v580 = vadd.f32 0.0, %v579
        %v581 = vpop.f32.mrb[0].mxu0
        %582 = vmatprep.mubr.f32.mxu0 0.0
        %583 = vmatmul.mubr.f32.gmra.mrb[0].mxu0 %v395
        %v584 = vpop.f32.mrb[0].mxu0
        %v585 = vadd.f32 0.0, %v584
        %v586 = vpop.f32.mrb[0].mxu0
        %587 = vmatprep.mubr.f32.mxu0 0.0
        %588 = vmatmul.mubr.f32.gmra.mrb[0].mxu0 %v398
        %v589 = vpop.f32.mrb[0].mxu0
        %v590 = vadd.f32 0.0, %v589
        %v591 = vpop.f32.mrb[0].mxu0
        %592 = vmatprep.mubr.f32.mxu0 0.0
        %593 = vmatmul.mubr.f32.gmra.mrb[0].mxu0 %v401
        %v594 = vpop.f32.mrb[0].mxu0
        %v595 = vadd.f32 0.0, %v594
        %v596 = vpop.f32.mrb[0].mxu0
        %597 = vmatprep.mubr.f32.mxu0 0.0
        %598 = vmatmul.mubr.f32.gmra.mrb[0].mxu0 %v404
        %v599 = vpop.f32.mrb[0].mxu0
        %v600 = vadd.f32 0.0, %v599
        %v601 = vpop.f32.mrb[0].mxu0
        %602 = vmatprep.mubr.f32.mxu0 0.0
        %603 = vmatmul.mubr.f32.gmra.mrb[0].mxu0 %v407
        %v604 = vpop.f32.mrb[0].mxu0
        %v605 = vadd.f32 0.0, %v604
        %v606 = vpop.f32.mrb[0].mxu0
        %607 = vmatprep.mubr.f32.mxu0 0.0
        %608 = vmatmul.mubr.f32.gmra.mrb[0].mxu0 %v410
        %v609 = vpop.f32.mrb[0].mxu0
        %v610 = vadd.f32 0.0, %v609
        %v611 = vpop.f32.mrb[0].mxu0
        %612 = vmatprep.mubr.f32.mxu0 0.0
        %613 = vmatmul.mubr.f32.gmra.mrb[0].mxu0 %v413
        %v614 = vpop.f32.mrb[0].mxu0
        %v615 = vadd.f32 0.0, %v614
        %v616 = vpop.f32.mrb[0].mxu0
        %617 = vmatprep.mubr.f32.mxu0 0.0
        %618 = vmatmul.mubr.f32.gmra.mrb[0].mxu0 %v416
        %v619 = vpop.f32.mrb[0].mxu0
        %v620 = vadd.f32 0.0, %v619
        %v621 = vpop.f32.mrb[0].mxu0
        %622 = vmatprep.mubr.f32.mxu0 0.0
        %623 = vmatmul.mubr.f32.gmra.mrb[0].mxu0 %v419
        %v624 = vpop.f32.mrb[0].mxu0
        %v625 = vadd.f32 0.0, %v624
        %v626 = vpop.f32.mrb[0].mxu0
        %627 = vmatprep.mubr.f32.mxu0 0.0
        %628 = vmatmul.mubr.f32.gmra.mrb[0].mxu0 %v422
        %v629 = vpop.f32.mrb[0].mxu0
        %v630 = vadd.f32 0.0, %v629
        %v631 = vpop.f32.mrb[0].mxu0
        %632 = vmatprep.mubr.f32.mxu0 0.0
        %633 = vmatmul.mubr.f32.gmra.mrb[0].mxu0 %v425
        %v634 = vpop.f32.mrb[0].mxu0
        %v635 = vadd.f32 0.0, %v634
        %v636 = vpop.f32.mrb[0].mxu0
        %637 = vmatprep.mubr.f32.mxu0 0.0
        %638 = vmatmul.mubr.f32.gmra.mrb[0].mxu0 %v428
        %v639 = vpop.f32.mrb[0].mxu0
        %v640 = vadd.f32 0.0, %v639
        %v641 = vpop.f32.mrb[0].mxu0
        %642 = vmatprep.mubr.f32.mxu0 0.0
        %643 = vmatmul.mubr.f32.gmra.mrb[0].mxu0 %v431
        %v644 = vpop.f32.mrb[0].mxu0
        %v645 = vadd.f32 0.0, %v644
        %v646 = vpop.f32.mrb[0].mxu0
        %647 = vmatprep.mubr.f32.mxu0 0.0
        %648 = vmatmul.mubr.f32.gmra.mrb[0].mxu0 %v434
        %v649 = vpop.f32.mrb[0].mxu0
        %v650 = vadd.f32 0.0, %v649
        %v651 = vpop.f32.mrb[0].mxu0
        %652 = vmatprep.mubr.f32.mxu0 0.0
        %653 = vmatmul.mubr.f32.gmra.mrb[0].mxu0 %v437
        %v654 = vpop.f32.mrb[0].mxu0
        %v655 = vadd.f32 0.0, %v654
        %v656 = vpop.f32.mrb[0].mxu0
        %657 = vmatprep.mubr.f32.mxu0 0.0
        %658 = vmatmul.mubr.f32.gmra.mrb[0].mxu0 %v440
        %v659 = vpop.f32.mrb[0].mxu0
        %v660 = vadd.f32 0.0, %v659
        %v661 = vpop.f32.mrb[0].mxu0
        %662 = vmatprep.mubr.f32.mxu0 0.0
        %663 = vmatmul.mubr.f32.gmra.mrb[0].mxu0 %v443
        %v664 = vpop.f32.mrb[0].mxu0
        %v665 = vadd.f32 0.0, %v664
        %v666 = vpop.f32.mrb[0].mxu0
        %667 = vmatprep.mubr.f32.mxu0 0.0
        %668 = vmatmul.mubr.f32.gmra.mrb[0].mxu0 %v446
        %v669 = vpop.f32.mrb[0].mxu0
        %v670 = vadd.f32 0.0, %v669
        %v671 = vpop.f32.mrb[0].mxu0
        %672 = vdwg.mxu0
        %v673 = vlaneseq
        %v674 = vshrl.u32 %v673, 7
        %v675 = vsub.s32 0, %v674
        %v676 = vrot.slane %v317, %v675
        %677 = vmatprep.subr.mxu0 0.0
        %678 = vmatpush1.msra.mxu0 %v515
        %679 = vmatprep.subr.mxu0 0.0
        %680 = vmatpush1.msra.mxu0 %v520
        %681 = vmatprep.subr.mxu0 0.0
        %682 = vmatpush1.msra.mxu0 %v525
        %683 = vmatprep.subr.mxu0 0.0
        %684 = vmatpush1.msra.mxu0 %v530
        %685 = vmatprep.subr.mxu0 0.0
        %686 = vmatpush1.msra.mxu0 %v535
        %687 = vmatprep.subr.mxu0 0.0
        %688 = vmatpush1.msra.mxu0 %v540
        %689 = vmatprep.subr.mxu0 0.0
        %690 = vmatpush1.msra.mxu0 %v545
        %691 = vmatprep.subr.mxu0 0.0
        %692 = vmatpush1.msra.mxu0 %v550
        %693 = vmatprep.subr.mxu0 0.0
        %694 = vmatpush1.msra.mxu0 %v555
        %695 = vmatprep.subr.mxu0 0.0
        %696 = vmatpush1.msra.mxu0 %v560
        %697 = vmatprep.subr.mxu0 0.0
        %698 = vmatpush1.msra.mxu0 %v565
        %699 = vmatprep.subr.mxu0 0.0
        %700 = vmatpush1.msra.mxu0 %v570
        %701 = vmatprep.subr.mxu0 0.0
        %702 = vmatpush1.msra.mxu0 %v575
        %703 = vmatprep.subr.mxu0 0.0
        %704 = vmatpush1.msra.mxu0 %v580
        %705 = vmatprep.subr.mxu0 0.0
        %706 = vmatpush1.msra.mxu0 %v585
        %707 = vmatprep.subr.mxu0 0.0
        %708 = vmatpush1.msra.mxu0 %v590
        %709 = vmatprep.subr.mxu0 0.0
        %710 = vmatpush1.msra.mxu0 %v595
        %711 = vmatprep.subr.mxu0 0.0
        %712 = vmatpush1.msra.mxu0 %v600
        %713 = vmatprep.subr.mxu0 0.0
        %714 = vmatpush1.msra.mxu0 %v605
        %715 = vmatprep.subr.mxu0 0.0
        %716 = vmatpush1.msra.mxu0 %v610
        %717 = vmatprep.subr.mxu0 0.0
        %718 = vmatpush1.msra.mxu0 %v615
        %719 = vmatprep.subr.mxu0 0.0
        %720 = vmatpush1.msra.mxu0 %v620
        %721 = vmatprep.subr.mxu0 0.0
        %722 = vmatpush1.msra.mxu0 %v625
        %723 = vmatprep.subr.mxu0 0.0
        %724 = vmatpush1.msra.mxu0 %v630
        %725 = vmatprep.subr.mxu0 0.0
        %726 = vmatpush1.msra.mxu0 %v635
        %727 = vmatprep.subr.mxu0 0.0
        %728 = vmatpush1.msra.mxu0 %v640
        %729 = vmatprep.subr.mxu0 0.0
        %730 = vmatpush1.msra.mxu0 %v645
        %731 = vmatprep.subr.mxu0 0.0
        %732 = vmatpush1.msra.mxu0 %v650
        %733 = vmatprep.subr.mxu0 0.0
        %734 = vmatpush1.msra.mxu0 %v655
        %735 = vmatprep.subr.mxu0 0.0
        %736 = vmatpush1.msra.mxu0 %v660
        %737 = vmatprep.subr.mxu0 0.0
        %738 = vmatpush1.msra.mxu0 %v665
        %739 = vmatprep.subr.mxu0 0.0
        %740 = vmatpush1.msra.mxu0 %v670
        %741 = vmatprep.mubr.f32.mxu0 %v254
        %742 = vmatmul.mubr.f32.gmra.mrb[0].mxu0 %v253
        %v743 = vpop.f32.mrb[0].mxu0
        %v744 = vadd.f32 %v676, %v743
        %v745 = vpop.f32.mrb[0].mxu0
        %746 = vmatprep.mubr.f32.mxu0 %v256
        %747 = vmatmul.mubr.f32.gmra.mrb[0].mxu0 %v255
        %v748 = vpop.f32.mrb[0].mxu0
        %v749 = vadd.f32 %v676, %v748
        %v750 = vpop.f32.mrb[0].mxu0
        %751 = vmatprep.mubr.f32.mxu0 %v258
        %752 = vmatmul.mubr.f32.gmra.mrb[0].mxu0 %v257
        %v753 = vpop.f32.mrb[0].mxu0
        %v754 = vadd.f32 %v676, %v753
        %v755 = vpop.f32.mrb[0].mxu0
        %756 = vmatprep.mubr.f32.mxu0 %v260
        %757 = vmatmul.mubr.f32.gmra.mrb[0].mxu0 %v259
        %v758 = vpop.f32.mrb[0].mxu0
        %v759 = vadd.f32 %v676, %v758
        %v760 = vpop.f32.mrb[0].mxu0
        %761 = vmatprep.mubr.f32.mxu0 %v262
        %762 = vmatmul.mubr.f32.gmra.mrb[0].mxu0 %v261
        %v763 = vpop.f32.mrb[0].mxu0
        %v764 = vadd.f32 %v676, %v763
        %v765 = vpop.f32.mrb[0].mxu0
        %766 = vmatprep.mubr.f32.mxu0 %v264
        %767 = vmatmul.mubr.f32.gmra.mrb[0].mxu0 %v263
        %v768 = vpop.f32.mrb[0].mxu0
        %v769 = vadd.f32 %v676, %v768
        %v770 = vpop.f32.mrb[0].mxu0
        %771 = vmatprep.mubr.f32.mxu0 %v266
        %772 = vmatmul.mubr.f32.gmra.mrb[0].mxu0 %v265
        %v773 = vpop.f32.mrb[0].mxu0
        %v774 = vadd.f32 %v676, %v773
        %v775 = vpop.f32.mrb[0].mxu0
        %776 = vmatprep.mubr.f32.mxu0 %v268
        %777 = vmatmul.mubr.f32.gmra.mrb[0].mxu0 %v267
        %v778 = vpop.f32.mrb[0].mxu0
        %v779 = vadd.f32 %v676, %v778
        %v780 = vpop.f32.mrb[0].mxu0
        %781 = vmatprep.mubr.f32.mxu0 %v270
        %782 = vmatmul.mubr.f32.gmra.mrb[0].mxu0 %v269
        %v783 = vpop.f32.mrb[0].mxu0
        %v784 = vadd.f32 %v676, %v783
        %v785 = vpop.f32.mrb[0].mxu0
        %786 = vmatprep.mubr.f32.mxu0 %v272
        %787 = vmatmul.mubr.f32.gmra.mrb[0].mxu0 %v271
        %v788 = vpop.f32.mrb[0].mxu0
        %v789 = vadd.f32 %v676, %v788
        %v790 = vpop.f32.mrb[0].mxu0
        %791 = vmatprep.mubr.f32.mxu0 %v274
        %792 = vmatmul.mubr.f32.gmra.mrb[0].mxu0 %v273
        %v793 = vpop.f32.mrb[0].mxu0
        %v794 = vadd.f32 %v676, %v793
        %v795 = vpop.f32.mrb[0].mxu0
        %796 = vmatprep.mubr.f32.mxu0 %v276
        %797 = vmatmul.mubr.f32.gmra.mrb[0].mxu0 %v275
        %v798 = vpop.f32.mrb[0].mxu0
        %v799 = vadd.f32 %v676, %v798
        %v800 = vpop.f32.mrb[0].mxu0
        %801 = vmatprep.mubr.f32.mxu0 %v278
        %802 = vmatmul.mubr.f32.gmra.mrb[0].mxu0 %v277
        %v803 = vpop.f32.mrb[0].mxu0
        %v804 = vadd.f32 %v676, %v803
        %v805 = vpop.f32.mrb[0].mxu0
        %806 = vmatprep.mubr.f32.mxu0 %v280
        %807 = vmatmul.mubr.f32.gmra.mrb[0].mxu0 %v279
        %v808 = vpop.f32.mrb[0].mxu0
        %v809 = vadd.f32 %v676, %v808
        %v810 = vpop.f32.mrb[0].mxu0
        %811 = vmatprep.mubr.f32.mxu0 %v282
        %812 = vmatmul.mubr.f32.gmra.mrb[0].mxu0 %v281
        %v813 = vpop.f32.mrb[0].mxu0
        %v814 = vadd.f32 %v676, %v813
        %v815 = vpop.f32.mrb[0].mxu0
        %816 = vmatprep.mubr.f32.mxu0 %v284
        %817 = vmatmul.mubr.f32.gmra.mrb[0].mxu0 %v283
        %v818 = vpop.f32.mrb[0].mxu0
        %v819 = vadd.f32 %v676, %v818
        %v820 = vpop.f32.mrb[0].mxu0
        %821 = vmatprep.mubr.f32.mxu0 %v286
        %822 = vmatmul.mubr.f32.gmra.mrb[0].mxu0 %v285
        %v823 = vpop.f32.mrb[0].mxu0
        %v824 = vadd.f32 %v676, %v823
        %v825 = vpop.f32.mrb[0].mxu0
        %826 = vmatprep.mubr.f32.mxu0 %v288
        %827 = vmatmul.mubr.f32.gmra.mrb[0].mxu0 %v287
        %v828 = vpop.f32.mrb[0].mxu0
        %v829 = vadd.f32 %v676, %v828
        %v830 = vpop.f32.mrb[0].mxu0
        %831 = vmatprep.mubr.f32.mxu0 %v290
        %832 = vmatmul.mubr.f32.gmra.mrb[0].mxu0 %v289
        %v833 = vpop.f32.mrb[0].mxu0
        %v834 = vadd.f32 %v676, %v833
        %v835 = vpop.f32.mrb[0].mxu0
        %836 = vmatprep.mubr.f32.mxu0 %v292
        %837 = vmatmul.mubr.f32.gmra.mrb[0].mxu0 %v291
        %v838 = vpop.f32.mrb[0].mxu0
        %v839 = vadd.f32 %v676, %v838
        %v840 = vpop.f32.mrb[0].mxu0
        %841 = vmatprep.mubr.f32.mxu0 %v294
        %842 = vmatmul.mubr.f32.gmra.mrb[0].mxu0 %v293
        %v843 = vpop.f32.mrb[0].mxu0
        %v844 = vadd.f32 %v676, %v843
        %v845 = vpop.f32.mrb[0].mxu0
        %846 = vmatprep.mubr.f32.mxu0 %v296
        %847 = vmatmul.mubr.f32.gmra.mrb[0].mxu0 %v295
        %v848 = vpop.f32.mrb[0].mxu0
        %v849 = vadd.f32 %v676, %v848
        %v850 = vpop.f32.mrb[0].mxu0
        %851 = vmatprep.mubr.f32.mxu0 %v298
        %852 = vmatmul.mubr.f32.gmra.mrb[0].mxu0 %v297
        %v853 = vpop.f32.mrb[0].mxu0
        %v854 = vadd.f32 %v676, %v853
        %v855 = vpop.f32.mrb[0].mxu0
        %856 = vmatprep.mubr.f32.mxu0 %v300
        %857 = vmatmul.mubr.f32.gmra.mrb[0].mxu0 %v299
        %v858 = vpop.f32.mrb[0].mxu0
        %v859 = vadd.f32 %v676, %v858
        %v860 = vpop.f32.mrb[0].mxu0
        %861 = vmatprep.mubr.f32.mxu0 %v302
        %862 = vmatmul.mubr.f32.gmra.mrb[0].mxu0 %v301
        %v863 = vpop.f32.mrb[0].mxu0
        %v864 = vadd.f32 %v676, %v863
        %v865 = vpop.f32.mrb[0].mxu0
        %866 = vmatprep.mubr.f32.mxu0 %v304
        %867 = vmatmul.mubr.f32.gmra.mrb[0].mxu0 %v303
        %v868 = vpop.f32.mrb[0].mxu0
        %v869 = vadd.f32 %v676, %v868
        %v870 = vpop.f32.mrb[0].mxu0
        %871 = vmatprep.mubr.f32.mxu0 %v306
        %872 = vmatmul.mubr.f32.gmra.mrb[0].mxu0 %v305
        %v873 = vpop.f32.mrb[0].mxu0
        %v874 = vadd.f32 %v676, %v873
        %v875 = vpop.f32.mrb[0].mxu0
        %876 = vmatprep.mubr.f32.mxu0 %v308
        %877 = vmatmul.mubr.f32.gmra.mrb[0].mxu0 %v307
        %v878 = vpop.f32.mrb[0].mxu0
        %v879 = vadd.f32 %v676, %v878
        %v880 = vpop.f32.mrb[0].mxu0
        %881 = vmatprep.mubr.f32.mxu0 %v310
        %882 = vmatmul.mubr.f32.gmra.mrb[0].mxu0 %v309
        %v883 = vpop.f32.mrb[0].mxu0
        %v884 = vadd.f32 %v676, %v883
        %v885 = vpop.f32.mrb[0].mxu0
        %886 = vmatprep.mubr.f32.mxu0 %v312
        %887 = vmatmul.mubr.f32.gmra.mrb[0].mxu0 %v311
        %v888 = vpop.f32.mrb[0].mxu0
        %v889 = vadd.f32 %v676, %v888
        %v890 = vpop.f32.mrb[0].mxu0
        %891 = vmatprep.mubr.f32.mxu0 %v314
        %892 = vmatmul.mubr.f32.gmra.mrb[0].mxu0 %v313
        %v893 = vpop.f32.mrb[0].mxu0
        %v894 = vadd.f32 %v676, %v893
        %v895 = vpop.f32.mrb[0].mxu0
        %896 = vmatprep.mubr.f32.mxu0 %v316
        %897 = vmatmul.mubr.f32.gmra.mrb[0].mxu0 %v315
        %v898 = vpop.f32.mrb[0].mxu0
        %v899 = vadd.f32 %v676, %v898
        %v900 = vpop.f32.mrb[0].mxu0
        %901 = vdwg.mxu0
        %v902 = vmax.f32 %v744, 0.0
        %v903 = vmax.f32 %v749, 0.0
        %v904 = vmax.f32 %v754, 0.0
        %v905 = vmax.f32 %v759, 0.0
        %v906 = vmax.f32 %v764, 0.0
        %v907 = vmax.f32 %v769, 0.0
        %v908 = vmax.f32 %v774, 0.0
        %v909 = vmax.f32 %v779, 0.0
        %v910 = vmax.f32 %v784, 0.0
        %v911 = vmax.f32 %v789, 0.0
        %v912 = vmax.f32 %v794, 0.0
        %v913 = vmax.f32 %v799, 0.0
        %v914 = vmax.f32 %v804, 0.0
        %v915 = vmax.f32 %v809, 0.0
        %v916 = vmax.f32 %v814, 0.0
        %v917 = vmax.f32 %v819, 0.0
        %v918 = vmax.f32 %v824, 0.0
        %v919 = vmax.f32 %v829, 0.0
        %v920 = vmax.f32 %v834, 0.0
        %v921 = vmax.f32 %v839, 0.0
        %v922 = vmax.f32 %v844, 0.0
        %v923 = vmax.f32 %v849, 0.0
        %v924 = vmax.f32 %v854, 0.0
        %v925 = vmax.f32 %v859, 0.0
        %v926 = vmax.f32 %v864, 0.0
        %v927 = vmax.f32 %v869, 0.0
        %v928 = vmax.f32 %v874, 0.0
        %v929 = vmax.f32 %v879, 0.0
        %v930 = vmax.f32 %v884, 0.0
        %v931 = vmax.f32 %v889, 0.0
        %v932 = vmax.f32 %v894, 0.0
        %v933 = vmax.f32 %v899, 0.0
        %v934 = vld [vmem:[%s3] sm:$0xff]
        %v935 = vld [vmem:[%s3 + $0x8] sm:$0xff]
        %v936 = vld [vmem:[%s3 + $0x10] sm:$0xff]
        %v937 = vld [vmem:[%s3 + $0x18] sm:$0xff]
        %v938 = vld [vmem:[%s3 + $0x20] sm:$0xff]
        %v939 = vld [vmem:[%s3 + $0x28] sm:$0xff]
        %v940 = vld [vmem:[%s3 + $0x30] sm:$0xff]
        %v941 = vld [vmem:[%s3 + $0x38] sm:$0xff]
        %v942 = vld [vmem:[%s3 + $0x40] sm:$0xff]
        %v943 = vld [vmem:[%s3 + $0x48] sm:$0xff]
        %v944 = vld [vmem:[%s3 + $0x50] sm:$0xff]
        %v945 = vld [vmem:[%s3 + $0x58] sm:$0xff]
        %v946 = vld [vmem:[%s3 + $0x60] sm:$0xff]
        %v947 = vld [vmem:[%s3 + $0x68] sm:$0xff]
        %v948 = vld [vmem:[%s3 + $0x70] sm:$0xff]
        %v949 = vld [vmem:[%s3 + $0x78] sm:$0xff]
        %950 = vmatprep.subr.mxu0 0.0
        %951 = vmatpush1.msra.mxu0 %v934
        %952 = vmatprep.subr.mxu0 0.0
        %953 = vmatpush1.msra.mxu0 %v935
        %954 = vmatprep.subr.mxu0 0.0
        %955 = vmatpush1.msra.mxu0 %v936
        %956 = vmatprep.subr.mxu0 0.0
        %957 = vmatpush1.msra.mxu0 %v937
        %958 = vmatprep.subr.mxu0 0.0
        %959 = vmatpush1.msra.mxu0 %v938
        %960 = vmatprep.subr.mxu0 0.0
        %961 = vmatpush1.msra.mxu0 %v939
        %962 = vmatprep.subr.mxu0 0.0
        %963 = vmatpush1.msra.mxu0 %v940
        %964 = vmatprep.subr.mxu0 0.0
        %965 = vmatpush1.msra.mxu0 %v941
        %966 = vmatprep.subr.mxu0 0.0
        %967 = vmatpush1.msra.mxu0 %v942
        %968 = vmatprep.subr.mxu0 0.0
        %969 = vmatpush1.msra.mxu0 %v943
        %970 = vmatprep.subr.mxu0 0.0
        %971 = vmatpush1.msra.mxu0 %v944
        %972 = vmatprep.subr.mxu0 0.0
        %973 = vmatpush1.msra.mxu0 %v945
        %974 = vmatprep.subr.mxu0 0.0
        %975 = vmatpush1.msra.mxu0 %v946
        %976 = vmatprep.subr.mxu0 0.0
        %977 = vmatpush1.msra.mxu0 %v947
        %978 = vmatprep.subr.mxu0 0.0
        %979 = vmatpush1.msra.mxu0 %v948
        %980 = vmatprep.subr.mxu0 0.0
        %981 = vmatpush1.msra.mxu0 %v949
        %982 = vmatprep.subr.mxu0 0.0
        %983 = vmatpush1.msra.mxu0 0.0
        %984 = vmatprep.subr.mxu0 0.0
        %985 = vmatpush1.msra.mxu0 0.0
        %986 = vmatprep.subr.mxu0 0.0
        %987 = vmatpush1.msra.mxu0 0.0
        %988 = vmatprep.subr.mxu0 0.0
        %989 = vmatpush1.msra.mxu0 0.0
        %990 = vmatprep.subr.mxu0 0.0
        %991 = vmatpush1.msra.mxu0 0.0
        %992 = vmatprep.subr.mxu0 0.0
        %993 = vmatpush1.msra.mxu0 0.0
        %994 = vmatprep.subr.mxu0 0.0
        %995 = vmatpush1.msra.mxu0 0.0
        %996 = vmatprep.subr.mxu0 0.0
        %997 = vmatpush1.msra.mxu0 0.0
        %998 = vmatprep.subr.mxu0 0.0
        %999 = vmatpush1.msra.mxu0 0.0
        %1000 = vmatprep.subr.mxu0 0.0
        %1001 = vmatpush1.msra.mxu0 0.0
        %1002 = vmatprep.subr.mxu0 0.0
        %1003 = vmatpush1.msra.mxu0 0.0
        %1004 = vmatprep.subr.mxu0 0.0
        %1005 = vmatpush1.msra.mxu0 0.0
        %1006 = vmatprep.subr.mxu0 0.0
        %1007 = vmatpush1.msra.mxu0 0.0
        %1008 = vmatprep.subr.mxu0 0.0
        %1009 = vmatpush1.msra.mxu0 0.0
        %1010 = vmatprep.subr.mxu0 0.0
        %1011 = vmatpush1.msra.mxu0 0.0
        %1012 = vmatprep.subr.mxu0 0.0
        %1013 = vmatpush1.msra.mxu0 0.0
        %1014 = vmatprep.mubr.f32.mxu0 0.0
        %1015 = vmatmul.mubr.f32.gmra.mrb[0].mxu0 %v902
        %v1016 = vpop.f32.mrb[0].mxu0
        %v1017 = vadd.f32 0.0, %v1016
        %v1018 = vpop.f32.mrb[0].mxu0
        %1019 = vmatprep.mubr.f32.mxu0 0.0
        %1020 = vmatmul.mubr.f32.gmra.mrb[0].mxu0 %v903
        %v1021 = vpop.f32.mrb[0].mxu0
        %v1022 = vadd.f32 0.0, %v1021
        %v1023 = vpop.f32.mrb[0].mxu0
        %1024 = vmatprep.mubr.f32.mxu0 0.0
        %1025 = vmatmul.mubr.f32.gmra.mrb[0].mxu0 %v904
        %v1026 = vpop.f32.mrb[0].mxu0
        %v1027 = vadd.f32 0.0, %v1026
        %v1028 = vpop.f32.mrb[0].mxu0
        %1029 = vmatprep.mubr.f32.mxu0 0.0
        %1030 = vmatmul.mubr.f32.gmra.mrb[0].mxu0 %v905
        %v1031 = vpop.f32.mrb[0].mxu0
        %v1032 = vadd.f32 0.0, %v1031
        %v1033 = vpop.f32.mrb[0].mxu0
        %1034 = vmatprep.mubr.f32.mxu0 0.0
        %1035 = vmatmul.mubr.f32.gmra.mrb[0].mxu0 %v906
        %v1036 = vpop.f32.mrb[0].mxu0
        %v1037 = vadd.f32 0.0, %v1036
        %v1038 = vpop.f32.mrb[0].mxu0
        %1039 = vmatprep.mubr.f32.mxu0 0.0
        %1040 = vmatmul.mubr.f32.gmra.mrb[0].mxu0 %v907
        %v1041 = vpop.f32.mrb[0].mxu0
        %v1042 = vadd.f32 0.0, %v1041
        %v1043 = vpop.f32.mrb[0].mxu0
        %1044 = vmatprep.mubr.f32.mxu0 0.0
        %1045 = vmatmul.mubr.f32.gmra.mrb[0].mxu0 %v908
        %v1046 = vpop.f32.mrb[0].mxu0
        %v1047 = vadd.f32 0.0, %v1046
        %v1048 = vpop.f32.mrb[0].mxu0
        %1049 = vmatprep.mubr.f32.mxu0 0.0
        %1050 = vmatmul.mubr.f32.gmra.mrb[0].mxu0 %v909
        %v1051 = vpop.f32.mrb[0].mxu0
        %v1052 = vadd.f32 0.0, %v1051
        %v1053 = vpop.f32.mrb[0].mxu0
        %1054 = vmatprep.mubr.f32.mxu0 0.0
        %1055 = vmatmul.mubr.f32.gmra.mrb[0].mxu0 %v910
        %v1056 = vpop.f32.mrb[0].mxu0
        %v1057 = vadd.f32 0.0, %v1056
        %v1058 = vpop.f32.mrb[0].mxu0
        %1059 = vmatprep.mubr.f32.mxu0 0.0
        %1060 = vmatmul.mubr.f32.gmra.mrb[0].mxu0 %v911
        %v1061 = vpop.f32.mrb[0].mxu0
        %v1062 = vadd.f32 0.0, %v1061
        %v1063 = vpop.f32.mrb[0].mxu0
        %1064 = vmatprep.mubr.f32.mxu0 0.0
        %1065 = vmatmul.mubr.f32.gmra.mrb[0].mxu0 %v912
        %v1066 = vpop.f32.mrb[0].mxu0
        %v1067 = vadd.f32 0.0, %v1066
        %v1068 = vpop.f32.mrb[0].mxu0
        %1069 = vmatprep.mubr.f32.mxu0 0.0
        %1070 = vmatmul.mubr.f32.gmra.mrb[0].mxu0 %v913
        %v1071 = vpop.f32.mrb[0].mxu0
        %v1072 = vadd.f32 0.0, %v1071
        %v1073 = vpop.f32.mrb[0].mxu0
        %1074 = vmatprep.mubr.f32.mxu0 0.0
        %1075 = vmatmul.mubr.f32.gmra.mrb[0].mxu0 %v914
        %v1076 = vpop.f32.mrb[0].mxu0
        %v1077 = vadd.f32 0.0, %v1076
        %v1078 = vpop.f32.mrb[0].mxu0
        %1079 = vmatprep.mubr.f32.mxu0 0.0
        %1080 = vmatmul.mubr.f32.gmra.mrb[0].mxu0 %v915
        %v1081 = vpop.f32.mrb[0].mxu0
        %v1082 = vadd.f32 0.0, %v1081
        %v1083 = vpop.f32.mrb[0].mxu0
        %1084 = vmatprep.mubr.f32.mxu0 0.0
        %1085 = vmatmul.mubr.f32.gmra.mrb[0].mxu0 %v916
        %v1086 = vpop.f32.mrb[0].mxu0
        %v1087 = vadd.f32 0.0, %v1086
        %v1088 = vpop.f32.mrb[0].mxu0
        %1089 = vmatprep.mubr.f32.mxu0 0.0
        %1090 = vmatmul.mubr.f32.gmra.mrb[0].mxu0 %v917
        %v1091 = vpop.f32.mrb[0].mxu0
        %v1092 = vadd.f32 0.0, %v1091
        %v1093 = vpop.f32.mrb[0].mxu0
        %1094 = vmatprep.mubr.f32.mxu0 0.0
        %1095 = vmatmul.mubr.f32.gmra.mrb[0].mxu0 %v918
        %v1096 = vpop.f32.mrb[0].mxu0
        %v1097 = vadd.f32 0.0, %v1096
        %v1098 = vpop.f32.mrb[0].mxu0
        %1099 = vmatprep.mubr.f32.mxu0 0.0
        %1100 = vmatmul.mubr.f32.gmra.mrb[0].mxu0 %v919
        %v1101 = vpop.f32.mrb[0].mxu0
        %v1102 = vadd.f32 0.0, %v1101
        %v1103 = vpop.f32.mrb[0].mxu0
        %1104 = vmatprep.mubr.f32.mxu0 0.0
        %1105 = vmatmul.mubr.f32.gmra.mrb[0].mxu0 %v920
        %v1106 = vpop.f32.mrb[0].mxu0
        %v1107 = vadd.f32 0.0, %v1106
        %v1108 = vpop.f32.mrb[0].mxu0
        %1109 = vmatprep.mubr.f32.mxu0 0.0
        %1110 = vmatmul.mubr.f32.gmra.mrb[0].mxu0 %v921
        %v1111 = vpop.f32.mrb[0].mxu0
        %v1112 = vadd.f32 0.0, %v1111
        %v1113 = vpop.f32.mrb[0].mxu0
        %1114 = vmatprep.mubr.f32.mxu0 0.0
        %1115 = vmatmul.mubr.f32.gmra.mrb[0].mxu0 %v922
        %v1116 = vpop.f32.mrb[0].mxu0
        %v1117 = vadd.f32 0.0, %v1116
        %v1118 = vpop.f32.mrb[0].mxu0
        %1119 = vmatprep.mubr.f32.mxu0 0.0
        %1120 = vmatmul.mubr.f32.gmra.mrb[0].mxu0 %v923
        %v1121 = vpop.f32.mrb[0].mxu0
        %v1122 = vadd.f32 0.0, %v1121
        %v1123 = vpop.f32.mrb[0].mxu0
        %1124 = vmatprep.mubr.f32.mxu0 0.0
        %1125 = vmatmul.mubr.f32.gmra.mrb[0].mxu0 %v924
        %v1126 = vpop.f32.mrb[0].mxu0
        %v1127 = vadd.f32 0.0, %v1126
        %v1128 = vpop.f32.mrb[0].mxu0
        %1129 = vmatprep.mubr.f32.mxu0 0.0
        %1130 = vmatmul.mubr.f32.gmra.mrb[0].mxu0 %v925
        %v1131 = vpop.f32.mrb[0].mxu0
        %v1132 = vadd.f32 0.0, %v1131
        %v1133 = vpop.f32.mrb[0].mxu0
        %1134 = vmatprep.mubr.f32.mxu0 0.0
        %1135 = vmatmul.mubr.f32.gmra.mrb[0].mxu0 %v926
        %v1136 = vpop.f32.mrb[0].mxu0
        %v1137 = vadd.f32 0.0, %v1136
        %v1138 = vpop.f32.mrb[0].mxu0
        %1139 = vmatprep.mubr.f32.mxu0 0.0
        %1140 = vmatmul.mubr.f32.gmra.mrb[0].mxu0 %v927
        %v1141 = vpop.f32.mrb[0].mxu0
        %v1142 = vadd.f32 0.0, %v1141
        %v1143 = vpop.f32.mrb[0].mxu0
        %1144 = vmatprep.mubr.f32.mxu0 0.0
        %1145 = vmatmul.mubr.f32.gmra.mrb[0].mxu0 %v928
        %v1146 = vpop.f32.mrb[0].mxu0
        %v1147 = vadd.f32 0.0, %v1146
        %v1148 = vpop.f32.mrb[0].mxu0
        %1149 = vmatprep.mubr.f32.mxu0 0.0
        %1150 = vmatmul.mubr.f32.gmra.mrb[0].mxu0 %v929
        %v1151 = vpop.f32.mrb[0].mxu0
        %v1152 = vadd.f32 0.0, %v1151
        %v1153 = vpop.f32.mrb[0].mxu0
        %1154 = vmatprep.mubr.f32.mxu0 0.0
        %1155 = vmatmul.mubr.f32.gmra.mrb[0].mxu0 %v930
        %v1156 = vpop.f32.mrb[0].mxu0
        %v1157 = vadd.f32 0.0, %v1156
        %v1158 = vpop.f32.mrb[0].mxu0
        %1159 = vmatprep.mubr.f32.mxu0 0.0
        %1160 = vmatmul.mubr.f32.gmra.mrb[0].mxu0 %v931
        %v1161 = vpop.f32.mrb[0].mxu0
        %v1162 = vadd.f32 0.0, %v1161
        %v1163 = vpop.f32.mrb[0].mxu0
        %1164 = vmatprep.mubr.f32.mxu0 0.0
        %1165 = vmatmul.mubr.f32.gmra.mrb[0].mxu0 %v932
        %v1166 = vpop.f32.mrb[0].mxu0
        %v1167 = vadd.f32 0.0, %v1166
        %v1168 = vpop.f32.mrb[0].mxu0
        %1169 = vmatprep.mubr.f32.mxu0 0.0
        %1170 = vmatmul.mubr.f32.gmra.mrb[0].mxu0 %v933
        %v1171 = vpop.f32.mrb[0].mxu0
        %v1172 = vadd.f32 0.0, %v1171
        %v1173 = vpop.f32.mrb[0].mxu0
        %1174 = vdwg.mxu0
        %v1175 = vlaneseq
        %v1176 = vshrl.u32 %v1175, 7
        %v1177 = vsub.s32 1, %v1176
        %v1178 = vrot.slane %v317, %v1177
        %1179 = vmatprep.subr.mxu0 0.0
        %1180 = vmatpush1.msra.mxu0 %v1017
        %1181 = vmatprep.subr.mxu0 0.0
        %1182 = vmatpush1.msra.mxu0 %v1022
        %1183 = vmatprep.subr.mxu0 0.0
        %1184 = vmatpush1.msra.mxu0 %v1027
        %1185 = vmatprep.subr.mxu0 0.0
        %1186 = vmatpush1.msra.mxu0 %v1032
        %1187 = vmatprep.subr.mxu0 0.0
        %1188 = vmatpush1.msra.mxu0 %v1037
        %1189 = vmatprep.subr.mxu0 0.0
        %1190 = vmatpush1.msra.mxu0 %v1042
        %1191 = vmatprep.subr.mxu0 0.0
        %1192 = vmatpush1.msra.mxu0 %v1047
        %1193 = vmatprep.subr.mxu0 0.0
        %1194 = vmatpush1.msra.mxu0 %v1052
        %1195 = vmatprep.subr.mxu0 0.0
        %1196 = vmatpush1.msra.mxu0 %v1057
        %1197 = vmatprep.subr.mxu0 0.0
        %1198 = vmatpush1.msra.mxu0 %v1062
        %1199 = vmatprep.subr.mxu0 0.0
        %1200 = vmatpush1.msra.mxu0 %v1067
        %1201 = vmatprep.subr.mxu0 0.0
        %1202 = vmatpush1.msra.mxu0 %v1072
        %1203 = vmatprep.subr.mxu0 0.0
        %1204 = vmatpush1.msra.mxu0 %v1077
        %1205 = vmatprep.subr.mxu0 0.0
        %1206 = vmatpush1.msra.mxu0 %v1082
        %1207 = vmatprep.subr.mxu0 0.0
        %1208 = vmatpush1.msra.mxu0 %v1087
        %1209 = vmatprep.subr.mxu0 0.0
        %1210 = vmatpush1.msra.mxu0 %v1092
        %1211 = vmatprep.subr.mxu0 0.0
        %1212 = vmatpush1.msra.mxu0 %v1097
        %1213 = vmatprep.subr.mxu0 0.0
        %1214 = vmatpush1.msra.mxu0 %v1102
        %1215 = vmatprep.subr.mxu0 0.0
        %1216 = vmatpush1.msra.mxu0 %v1107
        %1217 = vmatprep.subr.mxu0 0.0
        %1218 = vmatpush1.msra.mxu0 %v1112
        %1219 = vmatprep.subr.mxu0 0.0
        %1220 = vmatpush1.msra.mxu0 %v1117
        %1221 = vmatprep.subr.mxu0 0.0
        %1222 = vmatpush1.msra.mxu0 %v1122
        %1223 = vmatprep.subr.mxu0 0.0
        %1224 = vmatpush1.msra.mxu0 %v1127
        %1225 = vmatprep.subr.mxu0 0.0
        %1226 = vmatpush1.msra.mxu0 %v1132
        %1227 = vmatprep.subr.mxu0 0.0
        %1228 = vmatpush1.msra.mxu0 %v1137
        %1229 = vmatprep.subr.mxu0 0.0
        %1230 = vmatpush1.msra.mxu0 %v1142
        %1231 = vmatprep.subr.mxu0 0.0
        %1232 = vmatpush1.msra.mxu0 %v1147
        %1233 = vmatprep.subr.mxu0 0.0
        %1234 = vmatpush1.msra.mxu0 %v1152
        %1235 = vmatprep.subr.mxu0 0.0
        %1236 = vmatpush1.msra.mxu0 %v1157
        %1237 = vmatprep.subr.mxu0 0.0
        %1238 = vmatpush1.msra.mxu0 %v1162
        %1239 = vmatprep.subr.mxu0 0.0
        %1240 = vmatpush1.msra.mxu0 %v1167
        %1241 = vmatprep.subr.mxu0 0.0
        %1242 = vmatpush1.msra.mxu0 %v1172
        %1243 = vmatprep.mubr.f32.mxu0 %v254
        %1244 = vmatmul.mubr.f32.gmra.mrb[0].mxu0 %v253
        %v1245 = vpop.f32.mrb[0].mxu0
        %v1246 = vadd.f32 %v1178, %v1245
        %v1247 = vpop.f32.mrb[0].mxu0
        %1248 = vmatprep.mubr.f32.mxu0 %v256
        %1249 = vmatmul.mubr.f32.gmra.mrb[0].mxu0 %v255
        %v1250 = vpop.f32.mrb[0].mxu0
        %v1251 = vadd.f32 %v1178, %v1250
        %v1252 = vpop.f32.mrb[0].mxu0
        %1253 = vmatprep.mubr.f32.mxu0 %v258
        %1254 = vmatmul.mubr.f32.gmra.mrb[0].mxu0 %v257
        %v1255 = vpop.f32.mrb[0].mxu0
        %v1256 = vadd.f32 %v1178, %v1255
        %v1257 = vpop.f32.mrb[0].mxu0
        %1258 = vmatprep.mubr.f32.mxu0 %v260
        %1259 = vmatmul.mubr.f32.gmra.mrb[0].mxu0 %v259
        %v1260 = vpop.f32.mrb[0].mxu0
        %v1261 = vadd.f32 %v1178, %v1260
        %v1262 = vpop.f32.mrb[0].mxu0
        %1263 = vmatprep.mubr.f32.mxu0 %v262
        %1264 = vmatmul.mubr.f32.gmra.mrb[0].mxu0 %v261
        %v1265 = vpop.f32.mrb[0].mxu0
        %v1266 = vadd.f32 %v1178, %v1265
        %v1267 = vpop.f32.mrb[0].mxu0
        %1268 = vmatprep.mubr.f32.mxu0 %v264
        %1269 = vmatmul.mubr.f32.gmra.mrb[0].mxu0 %v263
        %v1270 = vpop.f32.mrb[0].mxu0
        %v1271 = vadd.f32 %v1178, %v1270
        %v1272 = vpop.f32.mrb[0].mxu0
        %1273 = vmatprep.mubr.f32.mxu0 %v266
        %1274 = vmatmul.mubr.f32.gmra.mrb[0].mxu0 %v265
        %v1275 = vpop.f32.mrb[0].mxu0
        %v1276 = vadd.f32 %v1178, %v1275
        %v1277 = vpop.f32.mrb[0].mxu0
        %1278 = vmatprep.mubr.f32.mxu0 %v268
        %1279 = vmatmul.mubr.f32.gmra.mrb[0].mxu0 %v267
        %v1280 = vpop.f32.mrb[0].mxu0
        %v1281 = vadd.f32 %v1178, %v1280
        %v1282 = vpop.f32.mrb[0].mxu0
        %1283 = vmatprep.mubr.f32.mxu0 %v270
        %1284 = vmatmul.mubr.f32.gmra.mrb[0].mxu0 %v269
        %v1285 = vpop.f32.mrb[0].mxu0
        %v1286 = vadd.f32 %v1178, %v1285
        %v1287 = vpop.f32.mrb[0].mxu0
        %1288 = vmatprep.mubr.f32.mxu0 %v272
        %1289 = vmatmul.mubr.f32.gmra.mrb[0].mxu0 %v271
        %v1290 = vpop.f32.mrb[0].mxu0
        %v1291 = vadd.f32 %v1178, %v1290
        %v1292 = vpop.f32.mrb[0].mxu0
        %1293 = vmatprep.mubr.f32.mxu0 %v274
        %1294 = vmatmul.mubr.f32.gmra.mrb[0].mxu0 %v273
        %v1295 = vpop.f32.mrb[0].mxu0
        %v1296 = vadd.f32 %v1178, %v1295
        %v1297 = vpop.f32.mrb[0].mxu0
        %1298 = vmatprep.mubr.f32.mxu0 %v276
        %1299 = vmatmul.mubr.f32.gmra.mrb[0].mxu0 %v275
        %v1300 = vpop.f32.mrb[0].mxu0
        %v1301 = vadd.f32 %v1178, %v1300
        %v1302 = vpop.f32.mrb[0].mxu0
        %1303 = vmatprep.mubr.f32.mxu0 %v278
        %1304 = vmatmul.mubr.f32.gmra.mrb[0].mxu0 %v277
        %v1305 = vpop.f32.mrb[0].mxu0
        %v1306 = vadd.f32 %v1178, %v1305
        %v1307 = vpop.f32.mrb[0].mxu0
        %1308 = vmatprep.mubr.f32.mxu0 %v280
        %1309 = vmatmul.mubr.f32.gmra.mrb[0].mxu0 %v279
        %v1310 = vpop.f32.mrb[0].mxu0
        %v1311 = vadd.f32 %v1178, %v1310
        %v1312 = vpop.f32.mrb[0].mxu0
        %1313 = vmatprep.mubr.f32.mxu0 %v282
        %1314 = vmatmul.mubr.f32.gmra.mrb[0].mxu0 %v281
        %v1315 = vpop.f32.mrb[0].mxu0
        %v1316 = vadd.f32 %v1178, %v1315
        %v1317 = vpop.f32.mrb[0].mxu0
        %1318 = vmatprep.mubr.f32.mxu0 %v284
        %1319 = vmatmul.mubr.f32.gmra.mrb[0].mxu0 %v283
        %v1320 = vpop.f32.mrb[0].mxu0
        %v1321 = vadd.f32 %v1178, %v1320
        %v1322 = vpop.f32.mrb[0].mxu0
        %1323 = vmatprep.mubr.f32.mxu0 %v286
        %1324 = vmatmul.mubr.f32.gmra.mrb[0].mxu0 %v285
        %v1325 = vpop.f32.mrb[0].mxu0
        %v1326 = vadd.f32 %v1178, %v1325
        %v1327 = vpop.f32.mrb[0].mxu0
        %1328 = vmatprep.mubr.f32.mxu0 %v288
        %1329 = vmatmul.mubr.f32.gmra.mrb[0].mxu0 %v287
        %v1330 = vpop.f32.mrb[0].mxu0
        %v1331 = vadd.f32 %v1178, %v1330
        %v1332 = vpop.f32.mrb[0].mxu0
        %1333 = vmatprep.mubr.f32.mxu0 %v290
        %1334 = vmatmul.mubr.f32.gmra.mrb[0].mxu0 %v289
        %v1335 = vpop.f32.mrb[0].mxu0
        %v1336 = vadd.f32 %v1178, %v1335
        %v1337 = vpop.f32.mrb[0].mxu0
        %1338 = vmatprep.mubr.f32.mxu0 %v292
        %1339 = vmatmul.mubr.f32.gmra.mrb[0].mxu0 %v291
        %v1340 = vpop.f32.mrb[0].mxu0
        %v1341 = vadd.f32 %v1178, %v1340
        %v1342 = vpop.f32.mrb[0].mxu0
        %1343 = vmatprep.mubr.f32.mxu0 %v294
        %1344 = vmatmul.mubr.f32.gmra.mrb[0].mxu0 %v293
        %v1345 = vpop.f32.mrb[0].mxu0
        %v1346 = vadd.f32 %v1178, %v1345
        %v1347 = vpop.f32.mrb[0].mxu0
        %1348 = vmatprep.mubr.f32.mxu0 %v296
        %1349 = vmatmul.mubr.f32.gmra.mrb[0].mxu0 %v295
        %v1350 = vpop.f32.mrb[0].mxu0
        %v1351 = vadd.f32 %v1178, %v1350
        %v1352 = vpop.f32.mrb[0].mxu0
        %1353 = vmatprep.mubr.f32.mxu0 %v298
        %1354 = vmatmul.mubr.f32.gmra.mrb[0].mxu0 %v297
        %v1355 = vpop.f32.mrb[0].mxu0
        %v1356 = vadd.f32 %v1178, %v1355
        %v1357 = vpop.f32.mrb[0].mxu0
        %1358 = vmatprep.mubr.f32.mxu0 %v300
        %1359 = vmatmul.mubr.f32.gmra.mrb[0].mxu0 %v299
        %v1360 = vpop.f32.mrb[0].mxu0
        %v1361 = vadd.f32 %v1178, %v1360
        %v1362 = vpop.f32.mrb[0].mxu0
        %1363 = vmatprep.mubr.f32.mxu0 %v302
        %1364 = vmatmul.mubr.f32.gmra.mrb[0].mxu0 %v301
        %v1365 = vpop.f32.mrb[0].mxu0
        %v1366 = vadd.f32 %v1178, %v1365
        %v1367 = vpop.f32.mrb[0].mxu0
        %1368 = vmatprep.mubr.f32.mxu0 %v304
        %1369 = vmatmul.mubr.f32.gmra.mrb[0].mxu0 %v303
        %v1370 = vpop.f32.mrb[0].mxu0
        %v1371 = vadd.f32 %v1178, %v1370
        %v1372 = vpop.f32.mrb[0].mxu0
        %1373 = vmatprep.mubr.f32.mxu0 %v306
        %1374 = vmatmul.mubr.f32.gmra.mrb[0].mxu0 %v305
        %v1375 = vpop.f32.mrb[0].mxu0
        %v1376 = vadd.f32 %v1178, %v1375
        %v1377 = vpop.f32.mrb[0].mxu0
        %1378 = vmatprep.mubr.f32.mxu0 %v308
        %1379 = vmatmul.mubr.f32.gmra.mrb[0].mxu0 %v307
        %v1380 = vpop.f32.mrb[0].mxu0
        %v1381 = vadd.f32 %v1178, %v1380
        %v1382 = vpop.f32.mrb[0].mxu0
        %1383 = vmatprep.mubr.f32.mxu0 %v310
        %1384 = vmatmul.mubr.f32.gmra.mrb[0].mxu0 %v309
        %v1385 = vpop.f32.mrb[0].mxu0
        %v1386 = vadd.f32 %v1178, %v1385
        %v1387 = vpop.f32.mrb[0].mxu0
        %1388 = vmatprep.mubr.f32.mxu0 %v312
        %1389 = vmatmul.mubr.f32.gmra.mrb[0].mxu0 %v311
        %v1390 = vpop.f32.mrb[0].mxu0
        %v1391 = vadd.f32 %v1178, %v1390
        %v1392 = vpop.f32.mrb[0].mxu0
        %1393 = vmatprep.mubr.f32.mxu0 %v314
        %1394 = vmatmul.mubr.f32.gmra.mrb[0].mxu0 %v313
        %v1395 = vpop.f32.mrb[0].mxu0
        %v1396 = vadd.f32 %v1178, %v1395
        %v1397 = vpop.f32.mrb[0].mxu0
        %1398 = vmatprep.mubr.f32.mxu0 %v316
        %1399 = vmatmul.mubr.f32.gmra.mrb[0].mxu0 %v315
        %v1400 = vpop.f32.mrb[0].mxu0
        %v1401 = vadd.f32 %v1178, %v1400
        %v1402 = vpop.f32.mrb[0].mxu0
        %1403 = vdwg.mxu0
        %v1404 = vmax.f32 %v1246, 0.0
        %v1405 = vmax.f32 %v1251, 0.0
        %v1406 = vmax.f32 %v1256, 0.0
        %v1407 = vmax.f32 %v1261, 0.0
        %v1408 = vmax.f32 %v1266, 0.0
        %v1409 = vmax.f32 %v1271, 0.0
        %v1410 = vmax.f32 %v1276, 0.0
        %v1411 = vmax.f32 %v1281, 0.0
        %v1412 = vmax.f32 %v1286, 0.0
        %v1413 = vmax.f32 %v1291, 0.0
        %v1414 = vmax.f32 %v1296, 0.0
        %v1415 = vmax.f32 %v1301, 0.0
        %v1416 = vmax.f32 %v1306, 0.0
        %v1417 = vmax.f32 %v1311, 0.0
        %v1418 = vmax.f32 %v1316, 0.0
        %v1419 = vmax.f32 %v1321, 0.0
        %v1420 = vmax.f32 %v1326, 0.0
        %v1421 = vmax.f32 %v1331, 0.0
        %v1422 = vmax.f32 %v1336, 0.0
        %v1423 = vmax.f32 %v1341, 0.0
        %v1424 = vmax.f32 %v1346, 0.0
        %v1425 = vmax.f32 %v1351, 0.0
        %v1426 = vmax.f32 %v1356, 0.0
        %v1427 = vmax.f32 %v1361, 0.0
        %v1428 = vmax.f32 %v1366, 0.0
        %v1429 = vmax.f32 %v1371, 0.0
        %v1430 = vmax.f32 %v1376, 0.0
        %v1431 = vmax.f32 %v1381, 0.0
        %v1432 = vmax.f32 %v1386, 0.0
        %v1433 = vmax.f32 %v1391, 0.0
        %v1434 = vmax.f32 %v1396, 0.0
        %v1435 = vmax.f32 %v1401, 0.0
        %v1436 = vld [vmem:[%s4] sm:$0xff]
        %v1437 = vld [vmem:[%s4 + $0x8] sm:$0xff]
        %v1438 = vld [vmem:[%s4 + $0x10] sm:$0xff]
        %v1439 = vld [vmem:[%s4 + $0x18] sm:$0xff]
        %v1440 = vld [vmem:[%s4 + $0x20] sm:$0xff]
        %v1441 = vld [vmem:[%s4 + $0x28] sm:$0xff]
        %v1442 = vld [vmem:[%s4 + $0x30] sm:$0xff]
        %v1443 = vld [vmem:[%s4 + $0x38] sm:$0xff]
        %v1444 = vld [vmem:[%s4 + $0x40] sm:$0xff]
        %v1445 = vld [vmem:[%s4 + $0x48] sm:$0xff]
        %v1446 = vld [vmem:[%s4 + $0x50] sm:$0xff]
        %v1447 = vld [vmem:[%s4 + $0x58] sm:$0xff]
        %v1448 = vld [vmem:[%s4 + $0x60] sm:$0xff]
        %v1449 = vld [vmem:[%s4 + $0x68] sm:$0xff]
        %v1450 = vld [vmem:[%s4 + $0x70] sm:$0xff]
        %v1451 = vld [vmem:[%s4 + $0x78] sm:$0xff]
        %1452 = vmatprep.subr.mxu0 0.0
        %1453 = vmatpush1.msra.mxu0 %v1436
        %1454 = vmatprep.subr.mxu0 0.0
        %1455 = vmatpush1.msra.mxu0 %v1437
        %1456 = vmatprep.subr.mxu0 0.0
        %1457 = vmatpush1.msra.mxu0 %v1438
        %1458 = vmatprep.subr.mxu0 0.0
        %1459 = vmatpush1.msra.mxu0 %v1439
        %1460 = vmatprep.subr.mxu0 0.0
        %1461 = vmatpush1.msra.mxu0 %v1440
        %1462 = vmatprep.subr.mxu0 0.0
        %1463 = vmatpush1.msra.mxu0 %v1441
        %1464 = vmatprep.subr.mxu0 0.0
        %1465 = vmatpush1.msra.mxu0 %v1442
        %1466 = vmatprep.subr.mxu0 0.0
        %1467 = vmatpush1.msra.mxu0 %v1443
        %1468 = vmatprep.subr.mxu0 0.0
        %1469 = vmatpush1.msra.mxu0 %v1444
        %1470 = vmatprep.subr.mxu0 0.0
        %1471 = vmatpush1.msra.mxu0 %v1445
        %1472 = vmatprep.subr.mxu0 0.0
        %1473 = vmatpush1.msra.mxu0 %v1446
        %1474 = vmatprep.subr.mxu0 0.0
        %1475 = vmatpush1.msra.mxu0 %v1447
        %1476 = vmatprep.subr.mxu0 0.0
        %1477 = vmatpush1.msra.mxu0 %v1448
        %1478 = vmatprep.subr.mxu0 0.0
        %1479 = vmatpush1.msra.mxu0 %v1449
        %1480 = vmatprep.subr.mxu0 0.0
        %1481 = vmatpush1.msra.mxu0 %v1450
        %1482 = vmatprep.subr.mxu0 0.0
        %1483 = vmatpush1.msra.mxu0 %v1451
        %1484 = vmatprep.subr.mxu0 0.0
        %1485 = vmatpush1.msra.mxu0 0.0
        %1486 = vmatprep.subr.mxu0 0.0
        %1487 = vmatpush1.msra.mxu0 0.0
        %1488 = vmatprep.subr.mxu0 0.0
        %1489 = vmatpush1.msra.mxu0 0.0
        %1490 = vmatprep.subr.mxu0 0.0
        %1491 = vmatpush1.msra.mxu0 0.0
        %1492 = vmatprep.subr.mxu0 0.0
        %1493 = vmatpush1.msra.mxu0 0.0
        %1494 = vmatprep.subr.mxu0 0.0
        %1495 = vmatpush1.msra.mxu0 0.0
        %1496 = vmatprep.subr.mxu0 0.0
        %1497 = vmatpush1.msra.mxu0 0.0
        %1498 = vmatprep.subr.mxu0 0.0
        %1499 = vmatpush1.msra.mxu0 0.0
        %1500 = vmatprep.subr.mxu0 0.0
        %1501 = vmatpush1.msra.mxu0 0.0
        %1502 = vmatprep.subr.mxu0 0.0
        %1503 = vmatpush1.msra.mxu0 0.0
        %1504 = vmatprep.subr.mxu0 0.0
        %1505 = vmatpush1.msra.mxu0 0.0
        %1506 = vmatprep.subr.mxu0 0.0
        %1507 = vmatpush1.msra.mxu0 0.0
        %1508 = vmatprep.subr.mxu0 0.0
        %1509 = vmatpush1.msra.mxu0 0.0
        %1510 = vmatprep.subr.mxu0 0.0
        %1511 = vmatpush1.msra.mxu0 0.0
        %1512 = vmatprep.subr.mxu0 0.0
        %1513 = vmatpush1.msra.mxu0 0.0
        %1514 = vmatprep.subr.mxu0 0.0
        %1515 = vmatpush1.msra.mxu0 0.0
        %1516 = vmatprep.mubr.f32.mxu0 0.0
        %1517 = vmatmul.mubr.f32.gmra.mrb[0].mxu0 %v1404
        %v1518 = vpop.f32.mrb[0].mxu0
        %v1519 = vadd.f32 0.0, %v1518
        %v1520 = vpop.f32.mrb[0].mxu0
        %1521 = vmatprep.mubr.f32.mxu0 0.0
        %1522 = vmatmul.mubr.f32.gmra.mrb[0].mxu0 %v1405
        %v1523 = vpop.f32.mrb[0].mxu0
        %v1524 = vadd.f32 0.0, %v1523
        %v1525 = vpop.f32.mrb[0].mxu0
        %1526 = vmatprep.mubr.f32.mxu0 0.0
        %1527 = vmatmul.mubr.f32.gmra.mrb[0].mxu0 %v1406
        %v1528 = vpop.f32.mrb[0].mxu0
        %v1529 = vadd.f32 0.0, %v1528
        %v1530 = vpop.f32.mrb[0].mxu0
        %1531 = vmatprep.mubr.f32.mxu0 0.0
        %1532 = vmatmul.mubr.f32.gmra.mrb[0].mxu0 %v1407
        %v1533 = vpop.f32.mrb[0].mxu0
        %v1534 = vadd.f32 0.0, %v1533
        %v1535 = vpop.f32.mrb[0].mxu0
        %1536 = vmatprep.mubr.f32.mxu0 0.0
        %1537 = vmatmul.mubr.f32.gmra.mrb[0].mxu0 %v1408
        %v1538 = vpop.f32.mrb[0].mxu0
        %v1539 = vadd.f32 0.0, %v1538
        %v1540 = vpop.f32.mrb[0].mxu0
        %1541 = vmatprep.mubr.f32.mxu0 0.0
        %1542 = vmatmul.mubr.f32.gmra.mrb[0].mxu0 %v1409
        %v1543 = vpop.f32.mrb[0].mxu0
        %v1544 = vadd.f32 0.0, %v1543
        %v1545 = vpop.f32.mrb[0].mxu0
        %1546 = vmatprep.mubr.f32.mxu0 0.0
        %1547 = vmatmul.mubr.f32.gmra.mrb[0].mxu0 %v1410
        %v1548 = vpop.f32.mrb[0].mxu0
        %v1549 = vadd.f32 0.0, %v1548
        %v1550 = vpop.f32.mrb[0].mxu0
        %1551 = vmatprep.mubr.f32.mxu0 0.0
        %1552 = vmatmul.mubr.f32.gmra.mrb[0].mxu0 %v1411
        %v1553 = vpop.f32.mrb[0].mxu0
        %v1554 = vadd.f32 0.0, %v1553
        %v1555 = vpop.f32.mrb[0].mxu0
        %1556 = vmatprep.mubr.f32.mxu0 0.0
        %1557 = vmatmul.mubr.f32.gmra.mrb[0].mxu0 %v1412
        %v1558 = vpop.f32.mrb[0].mxu0
        %v1559 = vadd.f32 0.0, %v1558
        %v1560 = vpop.f32.mrb[0].mxu0
        %1561 = vmatprep.mubr.f32.mxu0 0.0
        %1562 = vmatmul.mubr.f32.gmra.mrb[0].mxu0 %v1413
        %v1563 = vpop.f32.mrb[0].mxu0
        %v1564 = vadd.f32 0.0, %v1563
        %v1565 = vpop.f32.mrb[0].mxu0
        %1566 = vmatprep.mubr.f32.mxu0 0.0
        %1567 = vmatmul.mubr.f32.gmra.mrb[0].mxu0 %v1414
        %v1568 = vpop.f32.mrb[0].mxu0
        %v1569 = vadd.f32 0.0, %v1568
        %v1570 = vpop.f32.mrb[0].mxu0
        %1571 = vmatprep.mubr.f32.mxu0 0.0
        %1572 = vmatmul.mubr.f32.gmra.mrb[0].mxu0 %v1415
        %v1573 = vpop.f32.mrb[0].mxu0
        %v1574 = vadd.f32 0.0, %v1573
        %v1575 = vpop.f32.mrb[0].mxu0
        %1576 = vmatprep.mubr.f32.mxu0 0.0
        %1577 = vmatmul.mubr.f32.gmra.mrb[0].mxu0 %v1416
        %v1578 = vpop.f32.mrb[0].mxu0
        %v1579 = vadd.f32 0.0, %v1578
        %v1580 = vpop.f32.mrb[0].mxu0
        %1581 = vmatprep.mubr.f32.mxu0 0.0
        %1582 = vmatmul.mubr.f32.gmra.mrb[0].mxu0 %v1417
        %v1583 = vpop.f32.mrb[0].mxu0
        %v1584 = vadd.f32 0.0, %v1583
        %v1585 = vpop.f32.mrb[0].mxu0
        %1586 = vmatprep.mubr.f32.mxu0 0.0
        %1587 = vmatmul.mubr.f32.gmra.mrb[0].mxu0 %v1418
        %v1588 = vpop.f32.mrb[0].mxu0
        %v1589 = vadd.f32 0.0, %v1588
        %v1590 = vpop.f32.mrb[0].mxu0
        %1591 = vmatprep.mubr.f32.mxu0 0.0
        %1592 = vmatmul.mubr.f32.gmra.mrb[0].mxu0 %v1419
        %v1593 = vpop.f32.mrb[0].mxu0
        %v1594 = vadd.f32 0.0, %v1593
        %v1595 = vpop.f32.mrb[0].mxu0
        %1596 = vmatprep.mubr.f32.mxu0 0.0
        %1597 = vmatmul.mubr.f32.gmra.mrb[0].mxu0 %v1420
        %v1598 = vpop.f32.mrb[0].mxu0
        %v1599 = vadd.f32 0.0, %v1598
        %v1600 = vpop.f32.mrb[0].mxu0
        %1601 = vmatprep.mubr.f32.mxu0 0.0
        %1602 = vmatmul.mubr.f32.gmra.mrb[0].mxu0 %v1421
        %v1603 = vpop.f32.mrb[0].mxu0
        %v1604 = vadd.f32 0.0, %v1603
        %v1605 = vpop.f32.mrb[0].mxu0
        %1606 = vmatprep.mubr.f32.mxu0 0.0
        %1607 = vmatmul.mubr.f32.gmra.mrb[0].mxu0 %v1422
        %v1608 = vpop.f32.mrb[0].mxu0
        %v1609 = vadd.f32 0.0, %v1608
        %v1610 = vpop.f32.mrb[0].mxu0
        %1611 = vmatprep.mubr.f32.mxu0 0.0
        %1612 = vmatmul.mubr.f32.gmra.mrb[0].mxu0 %v1423
        %v1613 = vpop.f32.mrb[0].mxu0
        %v1614 = vadd.f32 0.0, %v1613
        %v1615 = vpop.f32.mrb[0].mxu0
        %1616 = vmatprep.mubr.f32.mxu0 0.0
        %1617 = vmatmul.mubr.f32.gmra.mrb[0].mxu0 %v1424
        %v1618 = vpop.f32.mrb[0].mxu0
        %v1619 = vadd.f32 0.0, %v1618
        %v1620 = vpop.f32.mrb[0].mxu0
        %1621 = vmatprep.mubr.f32.mxu0 0.0
        %1622 = vmatmul.mubr.f32.gmra.mrb[0].mxu0 %v1425
        %v1623 = vpop.f32.mrb[0].mxu0
        %v1624 = vadd.f32 0.0, %v1623
        %v1625 = vpop.f32.mrb[0].mxu0
        %1626 = vmatprep.mubr.f32.mxu0 0.0
        %1627 = vmatmul.mubr.f32.gmra.mrb[0].mxu0 %v1426
        %v1628 = vpop.f32.mrb[0].mxu0
        %v1629 = vadd.f32 0.0, %v1628
        %v1630 = vpop.f32.mrb[0].mxu0
        %1631 = vmatprep.mubr.f32.mxu0 0.0
        %1632 = vmatmul.mubr.f32.gmra.mrb[0].mxu0 %v1427
        %v1633 = vpop.f32.mrb[0].mxu0
        %v1634 = vadd.f32 0.0, %v1633
        %v1635 = vpop.f32.mrb[0].mxu0
        %1636 = vmatprep.mubr.f32.mxu0 0.0
        %1637 = vmatmul.mubr.f32.gmra.mrb[0].mxu0 %v1428
        %v1638 = vpop.f32.mrb[0].mxu0
        %v1639 = vadd.f32 0.0, %v1638
        %v1640 = vpop.f32.mrb[0].mxu0
        %1641 = vmatprep.mubr.f32.mxu0 0.0
        %1642 = vmatmul.mubr.f32.gmra.mrb[0].mxu0 %v1429
        %v1643 = vpop.f32.mrb[0].mxu0
        %v1644 = vadd.f32 0.0, %v1643
        %v1645 = vpop.f32.mrb[0].mxu0
        %1646 = vmatprep.mubr.f32.mxu0 0.0
        %1647 = vmatmul.mubr.f32.gmra.mrb[0].mxu0 %v1430
        %v1648 = vpop.f32.mrb[0].mxu0
        %v1649 = vadd.f32 0.0, %v1648
        %v1650 = vpop.f32.mrb[0].mxu0
        %1651 = vmatprep.mubr.f32.mxu0 0.0
        %1652 = vmatmul.mubr.f32.gmra.mrb[0].mxu0 %v1431
        %v1653 = vpop.f32.mrb[0].mxu0
        %v1654 = vadd.f32 0.0, %v1653
        %v1655 = vpop.f32.mrb[0].mxu0
        %1656 = vmatprep.mubr.f32.mxu0 0.0
        %1657 = vmatmul.mubr.f32.gmra.mrb[0].mxu0 %v1432
        %v1658 = vpop.f32.mrb[0].mxu0
        %v1659 = vadd.f32 0.0, %v1658
        %v1660 = vpop.f32.mrb[0].mxu0
        %1661 = vmatprep.mubr.f32.mxu0 0.0
        %1662 = vmatmul.mubr.f32.gmra.mrb[0].mxu0 %v1433
        %v1663 = vpop.f32.mrb[0].mxu0
        %v1664 = vadd.f32 0.0, %v1663
        %v1665 = vpop.f32.mrb[0].mxu0
        %1666 = vmatprep.mubr.f32.mxu0 0.0
        %1667 = vmatmul.mubr.f32.gmra.mrb[0].mxu0 %v1434
        %v1668 = vpop.f32.mrb[0].mxu0
        %v1669 = vadd.f32 0.0, %v1668
        %v1670 = vpop.f32.mrb[0].mxu0
        %1671 = vmatprep.mubr.f32.mxu0 0.0
        %1672 = vmatmul.mubr.f32.gmra.mrb[0].mxu0 %v1435
        %v1673 = vpop.f32.mrb[0].mxu0
        %v1674 = vadd.f32 0.0, %v1673
        %v1675 = vpop.f32.mrb[0].mxu0
        %1676 = vdwg.mxu0
        %v1677 = vlaneseq
        %v1678 = vshrl.u32 %v1677, 7
        %v1679 = vsub.s32 2, %v1678
        %v1680 = vrot.slane %v317, %v1679
        %1681 = vmatprep.subr.mxu0 0.0
        %1682 = vmatpush1.msra.mxu0 %v1519
        %1683 = vmatprep.subr.mxu0 0.0
        %1684 = vmatpush1.msra.mxu0 %v1524
        %1685 = vmatprep.subr.mxu0 0.0
        %1686 = vmatpush1.msra.mxu0 %v1529
        %1687 = vmatprep.subr.mxu0 0.0
        %1688 = vmatpush1.msra.mxu0 %v1534
        %1689 = vmatprep.subr.mxu0 0.0
        %1690 = vmatpush1.msra.mxu0 %v1539
        %1691 = vmatprep.subr.mxu0 0.0
        %1692 = vmatpush1.msra.mxu0 %v1544
        %1693 = vmatprep.subr.mxu0 0.0
        %1694 = vmatpush1.msra.mxu0 %v1549
        %1695 = vmatprep.subr.mxu0 0.0
        %1696 = vmatpush1.msra.mxu0 %v1554
        %1697 = vmatprep.subr.mxu0 0.0
        %1698 = vmatpush1.msra.mxu0 %v1559
        %1699 = vmatprep.subr.mxu0 0.0
        %1700 = vmatpush1.msra.mxu0 %v1564
        %1701 = vmatprep.subr.mxu0 0.0
        %1702 = vmatpush1.msra.mxu0 %v1569
        %1703 = vmatprep.subr.mxu0 0.0
        %1704 = vmatpush1.msra.mxu0 %v1574
        %1705 = vmatprep.subr.mxu0 0.0
        %1706 = vmatpush1.msra.mxu0 %v1579
        %1707 = vmatprep.subr.mxu0 0.0
        %1708 = vmatpush1.msra.mxu0 %v1584
        %1709 = vmatprep.subr.mxu0 0.0
        %1710 = vmatpush1.msra.mxu0 %v1589
        %1711 = vmatprep.subr.mxu0 0.0
        %1712 = vmatpush1.msra.mxu0 %v1594
        %1713 = vmatprep.subr.mxu0 0.0
        %1714 = vmatpush1.msra.mxu0 %v1599
        %1715 = vmatprep.subr.mxu0 0.0
        %1716 = vmatpush1.msra.mxu0 %v1604
        %1717 = vmatprep.subr.mxu0 0.0
        %1718 = vmatpush1.msra.mxu0 %v1609
        %1719 = vmatprep.subr.mxu0 0.0
        %1720 = vmatpush1.msra.mxu0 %v1614
        %1721 = vmatprep.subr.mxu0 0.0
        %1722 = vmatpush1.msra.mxu0 %v1619
        %1723 = vmatprep.subr.mxu0 0.0
        %1724 = vmatpush1.msra.mxu0 %v1624
        %1725 = vmatprep.subr.mxu0 0.0
        %1726 = vmatpush1.msra.mxu0 %v1629
        %1727 = vmatprep.subr.mxu0 0.0
        %1728 = vmatpush1.msra.mxu0 %v1634
        %1729 = vmatprep.subr.mxu0 0.0
        %1730 = vmatpush1.msra.mxu0 %v1639
        %1731 = vmatprep.subr.mxu0 0.0
        %1732 = vmatpush1.msra.mxu0 %v1644
        %1733 = vmatprep.subr.mxu0 0.0
        %1734 = vmatpush1.msra.mxu0 %v1649
        %1735 = vmatprep.subr.mxu0 0.0
        %1736 = vmatpush1.msra.mxu0 %v1654
        %1737 = vmatprep.subr.mxu0 0.0
        %1738 = vmatpush1.msra.mxu0 %v1659
        %1739 = vmatprep.subr.mxu0 0.0
        %1740 = vmatpush1.msra.mxu0 %v1664
        %1741 = vmatprep.subr.mxu0 0.0
        %1742 = vmatpush1.msra.mxu0 %v1669
        %1743 = vmatprep.subr.mxu0 0.0
        %1744 = vmatpush1.msra.mxu0 %v1674
        %1745 = vmatprep.mubr.f32.mxu0 %v254
        %1746 = vmatmul.mubr.f32.gmra.mrb[0].mxu0 %v253
        %v1747 = vpop.f32.mrb[0].mxu0
        %v1748 = vadd.f32 %v1680, %v1747
        %v1749 = vpop.f32.mrb[0].mxu0
        %1750 = vmatprep.mubr.f32.mxu0 %v256
        %1751 = vmatmul.mubr.f32.gmra.mrb[0].mxu0 %v255
        %v1752 = vpop.f32.mrb[0].mxu0
        %v1753 = vadd.f32 %v1680, %v1752
        %v1754 = vpop.f32.mrb[0].mxu0
        %1755 = vmatprep.mubr.f32.mxu0 %v258
        %1756 = vmatmul.mubr.f32.gmra.mrb[0].mxu0 %v257
        %v1757 = vpop.f32.mrb[0].mxu0
        %v1758 = vadd.f32 %v1680, %v1757
        %v1759 = vpop.f32.mrb[0].mxu0
        %1760 = vmatprep.mubr.f32.mxu0 %v260
        %1761 = vmatmul.mubr.f32.gmra.mrb[0].mxu0 %v259
        %v1762 = vpop.f32.mrb[0].mxu0
        %v1763 = vadd.f32 %v1680, %v1762
        %v1764 = vpop.f32.mrb[0].mxu0
        %1765 = vmatprep.mubr.f32.mxu0 %v262
        %1766 = vmatmul.mubr.f32.gmra.mrb[0].mxu0 %v261
        %v1767 = vpop.f32.mrb[0].mxu0
        %v1768 = vadd.f32 %v1680, %v1767
        %v1769 = vpop.f32.mrb[0].mxu0
        %1770 = vmatprep.mubr.f32.mxu0 %v264
        %1771 = vmatmul.mubr.f32.gmra.mrb[0].mxu0 %v263
        %v1772 = vpop.f32.mrb[0].mxu0
        %v1773 = vadd.f32 %v1680, %v1772
        %v1774 = vpop.f32.mrb[0].mxu0
        %1775 = vmatprep.mubr.f32.mxu0 %v266
        %1776 = vmatmul.mubr.f32.gmra.mrb[0].mxu0 %v265
        %v1777 = vpop.f32.mrb[0].mxu0
        %v1778 = vadd.f32 %v1680, %v1777
        %v1779 = vpop.f32.mrb[0].mxu0
        %1780 = vmatprep.mubr.f32.mxu0 %v268
        %1781 = vmatmul.mubr.f32.gmra.mrb[0].mxu0 %v267
        %v1782 = vpop.f32.mrb[0].mxu0
        %v1783 = vadd.f32 %v1680, %v1782
        %v1784 = vpop.f32.mrb[0].mxu0
        %1785 = vmatprep.mubr.f32.mxu0 %v270
        %1786 = vmatmul.mubr.f32.gmra.mrb[0].mxu0 %v269
        %v1787 = vpop.f32.mrb[0].mxu0
        %v1788 = vadd.f32 %v1680, %v1787
        %v1789 = vpop.f32.mrb[0].mxu0
        %1790 = vmatprep.mubr.f32.mxu0 %v272
        %1791 = vmatmul.mubr.f32.gmra.mrb[0].mxu0 %v271
        %v1792 = vpop.f32.mrb[0].mxu0
        %v1793 = vadd.f32 %v1680, %v1792
        %v1794 = vpop.f32.mrb[0].mxu0
        %1795 = vmatprep.mubr.f32.mxu0 %v274
        %1796 = vmatmul.mubr.f32.gmra.mrb[0].mxu0 %v273
        %v1797 = vpop.f32.mrb[0].mxu0
        %v1798 = vadd.f32 %v1680, %v1797
        %v1799 = vpop.f32.mrb[0].mxu0
        %1800 = vmatprep.mubr.f32.mxu0 %v276
        %1801 = vmatmul.mubr.f32.gmra.mrb[0].mxu0 %v275
        %v1802 = vpop.f32.mrb[0].mxu0
        %v1803 = vadd.f32 %v1680, %v1802
        %v1804 = vpop.f32.mrb[0].mxu0
        %1805 = vmatprep.mubr.f32.mxu0 %v278
        %1806 = vmatmul.mubr.f32.gmra.mrb[0].mxu0 %v277
        %v1807 = vpop.f32.mrb[0].mxu0
        %v1808 = vadd.f32 %v1680, %v1807
        %v1809 = vpop.f32.mrb[0].mxu0
        %1810 = vmatprep.mubr.f32.mxu0 %v280
        %1811 = vmatmul.mubr.f32.gmra.mrb[0].mxu0 %v279
        %v1812 = vpop.f32.mrb[0].mxu0
        %v1813 = vadd.f32 %v1680, %v1812
        %v1814 = vpop.f32.mrb[0].mxu0
        %1815 = vmatprep.mubr.f32.mxu0 %v282
        %1816 = vmatmul.mubr.f32.gmra.mrb[0].mxu0 %v281
        %v1817 = vpop.f32.mrb[0].mxu0
        %v1818 = vadd.f32 %v1680, %v1817
        %v1819 = vpop.f32.mrb[0].mxu0
        %1820 = vmatprep.mubr.f32.mxu0 %v284
        %1821 = vmatmul.mubr.f32.gmra.mrb[0].mxu0 %v283
        %v1822 = vpop.f32.mrb[0].mxu0
        %v1823 = vadd.f32 %v1680, %v1822
        %v1824 = vpop.f32.mrb[0].mxu0
        %1825 = vmatprep.mubr.f32.mxu0 %v286
        %1826 = vmatmul.mubr.f32.gmra.mrb[0].mxu0 %v285
        %v1827 = vpop.f32.mrb[0].mxu0
        %v1828 = vadd.f32 %v1680, %v1827
        %v1829 = vpop.f32.mrb[0].mxu0
        %1830 = vmatprep.mubr.f32.mxu0 %v288
        %1831 = vmatmul.mubr.f32.gmra.mrb[0].mxu0 %v287
        %v1832 = vpop.f32.mrb[0].mxu0
        %v1833 = vadd.f32 %v1680, %v1832
        %v1834 = vpop.f32.mrb[0].mxu0
        %1835 = vmatprep.mubr.f32.mxu0 %v290
        %1836 = vmatmul.mubr.f32.gmra.mrb[0].mxu0 %v289
        %v1837 = vpop.f32.mrb[0].mxu0
        %v1838 = vadd.f32 %v1680, %v1837
        %v1839 = vpop.f32.mrb[0].mxu0
        %1840 = vmatprep.mubr.f32.mxu0 %v292
        %1841 = vmatmul.mubr.f32.gmra.mrb[0].mxu0 %v291
        %v1842 = vpop.f32.mrb[0].mxu0
        %v1843 = vadd.f32 %v1680, %v1842
        %v1844 = vpop.f32.mrb[0].mxu0
        %1845 = vmatprep.mubr.f32.mxu0 %v294
        %1846 = vmatmul.mubr.f32.gmra.mrb[0].mxu0 %v293
        %v1847 = vpop.f32.mrb[0].mxu0
        %v1848 = vadd.f32 %v1680, %v1847
        %v1849 = vpop.f32.mrb[0].mxu0
        %1850 = vmatprep.mubr.f32.mxu0 %v296
        %1851 = vmatmul.mubr.f32.gmra.mrb[0].mxu0 %v295
        %v1852 = vpop.f32.mrb[0].mxu0
        %v1853 = vadd.f32 %v1680, %v1852
        %v1854 = vpop.f32.mrb[0].mxu0
        %1855 = vmatprep.mubr.f32.mxu0 %v298
        %1856 = vmatmul.mubr.f32.gmra.mrb[0].mxu0 %v297
        %v1857 = vpop.f32.mrb[0].mxu0
        %v1858 = vadd.f32 %v1680, %v1857
        %v1859 = vpop.f32.mrb[0].mxu0
        %1860 = vmatprep.mubr.f32.mxu0 %v300
        %1861 = vmatmul.mubr.f32.gmra.mrb[0].mxu0 %v299
        %v1862 = vpop.f32.mrb[0].mxu0
        %v1863 = vadd.f32 %v1680, %v1862
        %v1864 = vpop.f32.mrb[0].mxu0
        %1865 = vmatprep.mubr.f32.mxu0 %v302
        %1866 = vmatmul.mubr.f32.gmra.mrb[0].mxu0 %v301
        %v1867 = vpop.f32.mrb[0].mxu0
        %v1868 = vadd.f32 %v1680, %v1867
        %v1869 = vpop.f32.mrb[0].mxu0
        %1870 = vmatprep.mubr.f32.mxu0 %v304
        %1871 = vmatmul.mubr.f32.gmra.mrb[0].mxu0 %v303
        %v1872 = vpop.f32.mrb[0].mxu0
        %v1873 = vadd.f32 %v1680, %v1872
        %v1874 = vpop.f32.mrb[0].mxu0
        %1875 = vmatprep.mubr.f32.mxu0 %v306
        %1876 = vmatmul.mubr.f32.gmra.mrb[0].mxu0 %v305
        %v1877 = vpop.f32.mrb[0].mxu0
        %v1878 = vadd.f32 %v1680, %v1877
        %v1879 = vpop.f32.mrb[0].mxu0
        %1880 = vmatprep.mubr.f32.mxu0 %v308
        %1881 = vmatmul.mubr.f32.gmra.mrb[0].mxu0 %v307
        %v1882 = vpop.f32.mrb[0].mxu0
        %v1883 = vadd.f32 %v1680, %v1882
        %v1884 = vpop.f32.mrb[0].mxu0
        %1885 = vmatprep.mubr.f32.mxu0 %v310
        %1886 = vmatmul.mubr.f32.gmra.mrb[0].mxu0 %v309
        %v1887 = vpop.f32.mrb[0].mxu0
        %v1888 = vadd.f32 %v1680, %v1887
        %v1889 = vpop.f32.mrb[0].mxu0
        %1890 = vmatprep.mubr.f32.mxu0 %v312
        %1891 = vmatmul.mubr.f32.gmra.mrb[0].mxu0 %v311
        %v1892 = vpop.f32.mrb[0].mxu0
        %v1893 = vadd.f32 %v1680, %v1892
        %v1894 = vpop.f32.mrb[0].mxu0
        %1895 = vmatprep.mubr.f32.mxu0 %v314
        %1896 = vmatmul.mubr.f32.gmra.mrb[0].mxu0 %v313
        %v1897 = vpop.f32.mrb[0].mxu0
        %v1898 = vadd.f32 %v1680, %v1897
        %v1899 = vpop.f32.mrb[0].mxu0
        %1900 = vmatprep.mubr.f32.mxu0 %v316
        %1901 = vmatmul.mubr.f32.gmra.mrb[0].mxu0 %v315
        %v1902 = vpop.f32.mrb[0].mxu0
        %v1903 = vadd.f32 %v1680, %v1902
        %v1904 = vpop.f32.mrb[0].mxu0
        %1905 = vdwg.mxu0
        %1906 = vst [vmem:[%s245] sm:$0xff] %v1748
        %1907 = vst [vmem:[%s245 + $0x8] sm:$0xff] %v1753
        %1908 = vst [vmem:[%s245 + $0x10] sm:$0xff] %v1758
        %1909 = vst [vmem:[%s245 + $0x18] sm:$0xff] %v1763
        %1910 = vst [vmem:[%s245 + $0x20] sm:$0xff] %v1768
        %1911 = vst [vmem:[%s245 + $0x28] sm:$0xff] %v1773
        %1912 = vst [vmem:[%s245 + $0x30] sm:$0xff] %v1778
        %1913 = vst [vmem:[%s245 + $0x38] sm:$0xff] %v1783
        %1914 = vst [vmem:[%s245 + $0x40] sm:$0xff] %v1788
        %1915 = vst [vmem:[%s245 + $0x48] sm:$0xff] %v1793
        %1916 = vst [vmem:[%s245 + $0x50] sm:$0xff] %v1798
        %1917 = vst [vmem:[%s245 + $0x58] sm:$0xff] %v1803
        %1918 = vst [vmem:[%s245 + $0x60] sm:$0xff] %v1808
        %1919 = vst [vmem:[%s245 + $0x68] sm:$0xff] %v1813
        %1920 = vst [vmem:[%s245 + $0x70] sm:$0xff] %v1818
        %1921 = vst [vmem:[%s245 + $0x78] sm:$0xff] %v1823
        %1922 = vst [vmem:[%s245 + $0x80] sm:$0xff] %v1828
        %1923 = vst [vmem:[%s245 + $0x88] sm:$0xff] %v1833
        %1924 = vst [vmem:[%s245 + $0x90] sm:$0xff] %v1838
        %1925 = vst [vmem:[%s245 + $0x98] sm:$0xff] %v1843
        %1926 = vst [vmem:[%s245 + $0xa0] sm:$0xff] %v1848
        %1927 = vst [vmem:[%s245 + $0xa8] sm:$0xff] %v1853
        %1928 = vst [vmem:[%s245 + $0xb0] sm:$0xff] %v1858
        %1929 = vst [vmem:[%s245 + $0xb8] sm:$0xff] %v1863
        %1930 = vst [vmem:[%s245 + $0xc0] sm:$0xff] %v1868
        %1931 = vst [vmem:[%s245 + $0xc8] sm:$0xff] %v1873
        %1932 = vst [vmem:[%s245 + $0xd0] sm:$0xff] %v1878
        %1933 = vst [vmem:[%s245 + $0xd8] sm:$0xff] %v1883
        %1934 = vst [vmem:[%s245 + $0xe0] sm:$0xff] %v1888
        %1935 = vst [vmem:[%s245 + $0xe8] sm:$0xff] %v1893
        %1936 = vst [vmem:[%s245 + $0xf0] sm:$0xff] %v1898
        %1937 = vst [vmem:[%s245 + $0xf8] sm:$0xff] %v1903
        %s1938 = sand.u32 %s159, 1
        %s1939 = scalar_lea.sflag [#allocation3], %s1938
        %s1940 = sand.u32 %s159, 1
        %s1941 = smul.addr %s1940, 256
        %s1942 = scalar_lea.vmem [#allocation2], %s1941
        // Predicated region
        $region45: #{tpu_custom_call.1} parent=43 // pred_check
          %p1943 = pneg %p169
        $region46: #{tpu_custom_call.1} parent=43 // pred_check_branch
          %1945 = sbr.rel (%p1943) target = $region48
        $region47: #{tpu_custom_call.1} parent=43 // pred_region
          %s1946 = smul.u32 32, %s20
          %s1948 = ssub.s32 4096, 4096
          %1949 = vsyncadd %s1939, %s1948
          %s1950 = smul.addr %s1946, 128
          %s1951 = scalar_lea.hbm %s6, %s1950
          %s1952 = sshll.u32 %s1942, 4
          %s1953 = int_to_ptr.vmem [resolvable:$true] %s1952
          %1958 = dma.vmem_to_hbm [thread:$0]  %s1953, 4096, %s1951, %s1939, 128, 128, 8
        $region48: #{tpu_custom_call.1} parent=43 // pred_fallthru
          _
      $region44: #{tpu_custom_call.1} parent=5 // pred_fallthru
        _
      %p1959 = scmp.le.s32.totalorder 2, %s15
      // Predicated region
      $region49: #{tpu_custom_call.1} parent=5 // pred_check
        %p1960 = pneg %p1959
      $region50: #{tpu_custom_call.1} parent=5 // pred_check_branch
        %1962 = sbr.rel (%p1960) target = $region52
      $region51: #{tpu_custom_call.1} parent=5 // pred_region
        %s1963 = ssub.s32 %s15, 2
        // Predicated region
        $region53: #{tpu_custom_call.1} parent=51 // pred_check
          %p1964 = pneg %p175
        $region54: #{tpu_custom_call.1} parent=51 // pred_check_branch
          %1966 = sbr.rel (%p1964) target = $region56
        $region55: #{tpu_custom_call.1} parent=51 // pred_region
          %s1967 = sand.u32 %s160, 1
          %s1968 = scalar_lea.sflag [#allocation3], %s1967
          %s1969 = sand.u32 %s160, 1
          %s1970 = smul.addr %s1969, 256
          %s1971 = scalar_lea.vmem [#allocation2], %s1970
          %1972 = dma.done %s1968, 4096
        $region56: #{tpu_custom_call.1} parent=51 // pred_fallthru
          _
      $region52: #{tpu_custom_call.1} parent=5 // pred_fallthru
        _
    $region6: #{tpu_custom_call.1} parent=1 // loop_footer
      %s19 = sadd.s32 1, %s15
    $region7: #{tpu_custom_call.1} parent=1 // loop_footer_branch
      %14 = sbr.rel target = $region3
    $region8: #{tpu_custom_call.1} parent=1 // loop_exit
      _
    %1973 = vsyncpa [#allocation3], 1
    %s1974 = scalar_lea.sflag [#allocation3], 1
    %1975 = vsyncpa %s1974, 1

</llo_original>
